<compile_context>
chip_gen: v6e
topology: v6e:2x2x1
jax: 0.10.0
libtpu: 0.0.40
codegen_flags: <defaults>
</compile_context>

<pallas_src>
import math
import functools

import jax
import jax.numpy as jnp
import numpy as np
from jax.experimental import pallas as pl
from jax.experimental.pallas import tpu as pltpu


def _mha_kernel(a_ref, b_ref, mask_ref,
                wq_ref, bq_ref, wk_ref, bk_ref, wv_ref, bv_ref,
                wd_ref, bd_ref, gamma_ref, beta_ref,
                o_ref,
                kh_sc, vh_sc,
                *, num_heads, head_size, ln_eps):
    # Blocks: a_ref (1, tq, H) query-side, b_ref (1, Sb, H) key/value-side,
    #         mask_ref (1, 1, Sb) additive mask (head/query invariant).
    # Scratch: kh_sc / vh_sc (nh, Sb, dh) head-split K/V, resident across query tiles.
    qi = pl.program_id(1)
    a = a_ref[0]                      # (tq, H), input dtype (bf16 or f32)
    cdt = a.dtype                     # MXU operand dtype (bf16-native on v6e/v7x)

    def split_heads(x):
        # (S, H) f32 -> (nh, S, dh) in MXU dtype via static lane slices + stack.
        return jnp.stack(
            [x[:, h * head_size:(h + 1) * head_size] for h in range(num_heads)],
            axis=0).astype(cdt)

    # --- K/V projections: query-tile invariant, computed only on the first tile ---
    @pl.when(qi == 0)
    def _():
        b = b_ref[0]                  # (Sb, H)
        k = jnp.dot(b, wk_ref[...], preferred_element_type=jnp.float32) \
            + bk_ref[...].astype(jnp.float32)
        v = jnp.dot(b, wv_ref[...], preferred_element_type=jnp.float32) \
            + bv_ref[...].astype(jnp.float32)
        kh_sc[...] = split_heads(k)   # (nh, Sb, dh)
        vh_sc[...] = split_heads(v)   # (nh, Sb, dh)

    # --- Q projection for this tile; fold 1/sqrt(dh) here (tq*H multiplies) ---
    q = jnp.dot(a, wq_ref[...], preferred_element_type=jnp.float32) \
        + bq_ref[...].astype(jnp.float32)
    qh = split_heads(q * (1.0 / math.sqrt(head_size)))          # (nh, tq, dh)

    # Scores for all heads at once; mask broadcast over heads and query rows here.
    s = jnp.einsum('hqd,hkd->hqk', qh, kh_sc[...],
                   preferred_element_type=jnp.float32)           # (nh, tq, Sb)
    s = s + mask_ref[0].astype(jnp.float32)[None, :, :]

    # Numerically-stable softmax; statistics in f32, divide on the EUP.
    s = s - jnp.max(s, axis=-1, keepdims=True)
    p = jnp.exp(s)
    p = p * pl.reciprocal(jnp.sum(p, axis=-1, keepdims=True), approx=True)

    ctx_h = jnp.einsum('hqk,hkd->hqd', p.astype(cdt), vh_sc[...],
                       preferred_element_type=jnp.float32)       # (nh, tq, dh)
    # (nh, tq, dh) -> (tq, H): torch permute(0,2,1,3)+reshape / einsum('bfnd,ndh->bfh').
    ctx = jnp.concatenate([ctx_h[h] for h in range(num_heads)], axis=-1)

    # --- output projection + residual + LayerNorm (biased variance), stats in f32 ---
    proj = jnp.dot(ctx.astype(cdt), wd_ref[...],
                   preferred_element_type=jnp.float32) + bd_ref[...].astype(jnp.float32)
    x = a.astype(jnp.float32) + proj
    mean = jnp.mean(x, axis=-1, keepdims=True)
    var = jnp.mean((x - mean) ** 2, axis=-1, keepdims=True)
    y = (x - mean) * jax.lax.rsqrt(var + ln_eps)
    y = y * gamma_ref[...].astype(jnp.float32) + beta_ref[...].astype(jnp.float32)

    o_ref[0] = y.astype(o_ref.dtype)


def mha_forward(input_a, input_b, params, attention_mask=None,
                *, num_heads, ln_eps=1e-12, q_tile=256):
    """input_a: (B, Sa, H) query side, input_b: (B, Sb, H) key/value side.
    attention_mask: additive, head/query-invariant; None or broadcastable to (B, 1, Sb)
    (e.g. the usual BERT (B, 1, 1, Sb) mask)."""
    B, Sa, H = input_a.shape
    _, Sb, _ = input_b.shape
    head_size = H // num_heads

    # Mask stays at its natural (B, 1, Sb) shape -- never broadcast to (B, Sa, Sb).
    if attention_mask is None:
        mask = jnp.zeros((B, 1, Sb), dtype=jnp.float32)
    else:
        mask = attention_mask.astype(jnp.float32).reshape(B, -1, Sb)
        if mask.shape[1] != 1:
            raise ValueError("attention_mask must be query/head-invariant "
                             "(broadcastable to (B, 1, Sb))")

    wq, bq = params["wq"], params["bq"].reshape(1, H)
    wk, bk = params["wk"], params["bk"].reshape(1, H)
    wv, bv = params["wv"], params["bv"].reshape(1, H)
    wd, bd = params["wd"], params["bd"].reshape(1, H)
    gamma = params["gamma"].reshape(1, H)
    beta = params["beta"].reshape(1, H)

    # Query tiling: second grid axis so long Sa pipelines (K/V held in scratch
    # across tiles and only recomputed when the batch index changes).
    tq = Sa
    if Sa > q_tile:
        tq = max(t for t in range(1, q_tile + 1) if Sa % t == 0)
    grid = (B, Sa // tq)

    kernel = functools.partial(_mha_kernel, num_heads=num_heads,
                               head_size=head_size, ln_eps=ln_eps)

    mat_spec = pl.BlockSpec((H, H), lambda b, qi: (0, 0))   # grid-invariant weights
    vec_spec = pl.BlockSpec((1, H), lambda b, qi: (0, 0))

    # VMEM budget: pipelined activation blocks + weights + scratch + temporaries,
    # with 2x headroom, clamped to the generation's physical VMEM.
    act_b = max(int(input_a.dtype.itemsize), 4)   # Pallas double-buffers blocks
    w_b = int(params["wq"].dtype.itemsize)
    f32 = 4
    est = (2 * (tq * H + Sb * H + Sb + tq * H) * act_b          # in/out blocks (x2 buffers)
           + 2 * (4 * H * H + 6 * H) * w_b                      # weights (conservatively x2)
           + 2 * Sb * H * int(input_a.dtype.itemsize)           # K/V scratch (head-split)
           + (tq + 2 * Sb) * H * (f32 + int(input_a.dtype.itemsize))  # q/k/v temporaries
           + 2 * num_heads * tq * Sb * f32                      # scores + probs
           + 3 * tq * H * f32)                                  # ctx / residual / LN temps
    try:
        vmem_cap = int(pltpu.get_tpu_info().vmem_capacity_bytes)
    except Exception:
        vmem_cap = 64 * 1024 * 1024
    vmem_limit = int(min(max(2 * est, 32 * 1024 * 1024), vmem_cap - 4 * 1024 * 1024))

    return pl.pallas_call(
        kernel,
        out_shape=jax.ShapeDtypeStruct((B, Sa, H), input_a.dtype),
        grid_spec=pltpu.PrefetchScalarGridSpec(
            num_scalar_prefetch=0,
            grid=grid,
            in_specs=[
                pl.BlockSpec((1, tq, H), lambda b, qi: (b, qi, 0)),   # input_a block
                pl.BlockSpec((1, Sb, H), lambda b, qi: (b, 0, 0)),    # input_b (full Sb)
                pl.BlockSpec((1, 1, Sb), lambda b, qi: (b, 0, 0)),    # additive mask (un-broadcast)
                mat_spec, vec_spec,                                   # query W, b
                mat_spec, vec_spec,                                   # key   W, b
                mat_spec, vec_spec,                                   # value W, b
                mat_spec, vec_spec,                                   # dense W, b
                vec_spec, vec_spec,                                   # LN gamma, beta
            ],
            out_specs=pl.BlockSpec((1, tq, H), lambda b, qi: (b, qi, 0)),
            scratch_shapes=[
                pltpu.VMEM((num_heads, Sb, head_size), input_a.dtype),  # K heads
                pltpu.VMEM((num_heads, Sb, head_size), input_a.dtype),  # V heads
            ],
        ),
        compiler_params=pltpu.CompilerParams(
            # qi carries the K/V scratch dependency -> "arbitrary"; batch is parallel.
            dimension_semantics=("parallel", "arbitrary"),
            vmem_limit_bytes=vmem_limit,
        ),
    )(input_a, input_b, mask, wq, bq, wk, bk, wv, bv, wd, bd, gamma, beta)


def _reference(input_a, input_b, params, mask, num_heads, ln_eps):
    """Pure-JAX (f32) reference mirroring the PyTorch forward (phrase=False, eval)."""
    B, Sa, H = input_a.shape
    Sb = input_b.shape[1]
    dh = H // num_heads
    q = input_a @ params["wq"] + params["bq"]
    k = input_b @ params["wk"] + params["bk"]
    v = input_b @ params["wv"] + params["bv"]

    def split(x, S):
        return x.reshape(B, S, num_heads, dh).transpose(0, 2, 1, 3)

    qh, kh, vh = split(q, Sa), split(k, Sb), split(v, Sb)
    scores = jnp.einsum("bhqd,bhkd->bhqk", qh, kh) / math.sqrt(dh)
    if mask is not None:
        scores = scores + mask[:, None, :, :]
    probs = jax.nn.softmax(scores, axis=-1)
    ctx = jnp.einsum("bhqk,bhkd->bhqd", probs, vh)
    ctx = ctx.transpose(0, 2, 1, 3).reshape(B, Sa, H)
    proj = ctx @ params["wd"] + params["bd"]
    x = input_a + proj
    mean = jnp.mean(x, axis=-1, keepdims=True)
    var = jnp.mean((x - mean) ** 2, axis=-1, keepdims=True)
    return (x - mean) / jnp.sqrt(var + ln_eps) * params["gamma"] + params["beta"]


if __name__ == "__main__":
    # Small config: hidden=32, heads=4 (head_size=8), batch=2, seq=8.
    B, Sa, Sb, H, NH = 2, 8, 8, 32, 4
    LN_EPS = 1e-12

    key = jax.random.PRNGKey(0)
    keys = jax.random.split(key, 12)
    scale = 0.05
    params = {
        "wq": scale * jax.random.normal(keys[0], (H, H), jnp.float32),
        "bq": scale * jax.random.normal(keys[1], (H,), jnp.float32),
        "wk": scale * jax.random.normal(keys[2], (H, H), jnp.float32),
        "bk": scale * jax.random.normal(keys[3], (H,), jnp.float32),
        "wv": scale * jax.random.normal(keys[4], (H, H), jnp.float32),
        "bv": scale * jax.random.normal(keys[5], (H,), jnp.float32),
        "wd": scale * jax.random.normal(keys[6], (H, H), jnp.float32),
        "bd": scale * jax.random.normal(keys[7], (H,), jnp.float32),
        "gamma": jnp.ones((H,), jnp.float32),
        "beta": jnp.zeros((H,), jnp.float32),
    }

    input_a = jax.random.normal(keys[8], (B, Sa, H), jnp.float32)
    input_b = jax.random.normal(keys[9], (B, Sb, H), jnp.float32)
    # Standard BERT-style additive mask (0 valid, -10000 masked), head/query-invariant.
    mask = jnp.where(jax.random.uniform(keys[10], (B, 1, Sb)) < 0.9, 0.0, -10000.0)

    # ---- float32 run: check against the pure-JAX reference ----
    out = mha_forward(input_a, input_b, params, attention_mask=mask,
                      num_heads=NH, ln_eps=LN_EPS)
    out = jax.block_until_ready(out)
    ref = _reference(input_a, input_b, params,
                     jnp.broadcast_to(mask, (B, Sa, Sb)), NH, LN_EPS)
    np.testing.assert_allclose(np.asarray(out), np.asarray(ref), atol=5e-3, rtol=5e-3)

    # ---- bfloat16 run: MXU-native operand path ----
    cast_bf = lambda t: jax.tree_util.tree_map(lambda x: x.astype(jnp.bfloat16), t)
    params_bf = cast_bf(params)
    a_bf = input_a.astype(jnp.bfloat16)
    b_bf = input_b.astype(jnp.bfloat16)
    out_bf = mha_forward(a_bf, b_bf, params_bf, attention_mask=mask,
                         num_heads=NH, ln_eps=LN_EPS)
    out_bf = jax.block_until_ready(out_bf)
    # Compare against the reference evaluated on the bf16-rounded inputs (f32 math).
    params_rt = jax.tree_util.tree_map(lambda x: x.astype(jnp.float32), params_bf)
    ref_bf = _reference(a_bf.astype(jnp.float32), b_bf.astype(jnp.float32), params_rt,
                        jnp.broadcast_to(mask, (B, Sa, Sb)), NH, LN_EPS)
    np.testing.assert_allclose(np.asarray(out_bf.astype(jnp.float32)), np.asarray(ref_bf),
                               atol=8e-2, rtol=8e-2)

    # ---- multi query-tile run (Sa=16, tq=8): exercises K/V scratch reuse across tiles ----
    Sa2 = 16
    input_a2 = jax.random.normal(keys[11], (B, Sa2, H), jnp.float32)
    out2 = mha_forward(input_a2, input_b, params, attention_mask=mask,
                       num_heads=NH, ln_eps=LN_EPS, q_tile=8)
    out2 = jax.block_until_ready(out2)
    ref2 = _reference(input_a2, input_b, params,
                      jnp.broadcast_to(mask, (B, Sa2, Sb)), NH, LN_EPS)
    np.testing.assert_allclose(np.asarray(out2), np.asarray(ref2), atol=5e-3, rtol=5e-3)

    print("KERNEL_OK")
</pallas_src>

<mosaic_0001>
module attributes {stable_mosaic.version = 11 : i64} {
  func.func @_mha_kernel(%arg0: i32, %arg1: i32, %arg2: memref<1x8x32xf32, #tpu.memory_space<vmem>>, %arg3: memref<1x8x32xf32, #tpu.memory_space<vmem>>, %arg4: memref<1x1x8xf32, #tpu.memory_space<vmem>>, %arg5: memref<32x32xf32, #tpu.memory_space<vmem>>, %arg6: memref<1x32xf32, #tpu.memory_space<vmem>>, %arg7: memref<32x32xf32, #tpu.memory_space<vmem>>, %arg8: memref<1x32xf32, #tpu.memory_space<vmem>>, %arg9: memref<32x32xf32, #tpu.memory_space<vmem>>, %arg10: memref<1x32xf32, #tpu.memory_space<vmem>>, %arg11: memref<32x32xf32, #tpu.memory_space<vmem>>, %arg12: memref<1x32xf32, #tpu.memory_space<vmem>>, %arg13: memref<1x32xf32, #tpu.memory_space<vmem>>, %arg14: memref<1x32xf32, #tpu.memory_space<vmem>>, %arg15: memref<1x8x32xf32, #tpu.memory_space<vmem>>, %arg16: memref<4x8x8xf32, #tpu.memory_space<vmem>>, %arg17: memref<4x8x8xf32, #tpu.memory_space<vmem>>) attributes {dimension_semantics = [#tpu.dimension_semantics<parallel>, #tpu.dimension_semantics<arbitrary>], iteration_bounds = array<i64: 2, 1>, scalar_prefetch = 0 : i64, scratch_operands = 2 : i64, tpu.core_type = #tpu.core_type<tc>, window_params = [{transform_indices = @transform_0, window_bounds = array<i64: 1, 8, 32>}, {transform_indices = @transform_1, window_bounds = array<i64: 1, 8, 32>}, {transform_indices = @transform_2, window_bounds = array<i64: 1, 1, 8>}, {pipeline_mode = #tpu.pipeline_mode<synchronous>, transform_indices = @transform_3, window_bounds = array<i64: 32, 32>}, {pipeline_mode = #tpu.pipeline_mode<synchronous>, transform_indices = @transform_4, window_bounds = array<i64: 1, 32>}, {pipeline_mode = #tpu.pipeline_mode<synchronous>, transform_indices = @transform_5, window_bounds = array<i64: 32, 32>}, {pipeline_mode = #tpu.pipeline_mode<synchronous>, transform_indices = @transform_6, window_bounds = array<i64: 1, 32>}, {pipeline_mode = #tpu.pipeline_mode<synchronous>, transform_indices = @transform_7, window_bounds = array<i64: 32, 32>}, {pipeline_mode = #tpu.pipeline_mode<synchronous>, transform_indices = @transform_8, window_bounds = array<i64: 1, 32>}, {pipeline_mode = #tpu.pipeline_mode<synchronous>, transform_indices = @transform_9, window_bounds = array<i64: 32, 32>}, {pipeline_mode = #tpu.pipeline_mode<synchronous>, transform_indices = @transform_10, window_bounds = array<i64: 1, 32>}, {pipeline_mode = #tpu.pipeline_mode<synchronous>, transform_indices = @transform_11, window_bounds = array<i64: 1, 32>}, {pipeline_mode = #tpu.pipeline_mode<synchronous>, transform_indices = @transform_12, window_bounds = array<i64: 1, 32>}, {transform_indices = @transform_13, window_bounds = array<i64: 1, 8, 32>}]} {
    %c0 = arith.constant 0 : index
    %c0_0 = arith.constant 0 : index
    %c0_1 = arith.constant 0 : index
    %0 = vector.load %arg2[%c0, %c0_0, %c0_1] : memref<1x8x32xf32, #tpu.memory_space<vmem>>, vector<1x8x32xf32>
    %1 = vector.shape_cast %0 : vector<1x8x32xf32> to vector<8x32xf32>
    %c0_i32 = arith.constant 0 : i32
    %2 = arith.cmpi eq, %arg1, %c0_i32 : i32
    %3 = arith.extui %2 : i1 to i32
    %c0_i32_2 = arith.constant 0 : i32
    %4 = arith.cmpi ne, %3, %c0_i32_2 : i32
    scf.if %4 {
      %c0_38 = arith.constant 0 : index
      %c0_39 = arith.constant 0 : index
      %c0_40 = arith.constant 0 : index
      %82 = vector.load %arg3[%c0_38, %c0_39, %c0_40] : memref<1x8x32xf32, #tpu.memory_space<vmem>>, vector<1x8x32xf32>
      %83 = vector.shape_cast %82 : vector<1x8x32xf32> to vector<8x32xf32>
      %c0_41 = arith.constant 0 : index
      %c0_42 = arith.constant 0 : index
      %84 = vector.load %arg7[%c0_41, %c0_42] : memref<32x32xf32, #tpu.memory_space<vmem>>, vector<32x32xf32>
      %cst_43 = arith.constant dense<0.000000e+00> : vector<8x32xf32>
      %85 = tpu.matmul %83, %84, %cst_43 {dimension_numbers = #tpu.dot_dimension_numbers<[1], [0], [0], [1], [0, 0, 1, 1], [], []>} : vector<8x32xf32>, vector<32x32xf32>, vector<8x32xf32> -> vector<8x32xf32>
      %c0_44 = arith.constant 0 : index
      %c0_45 = arith.constant 0 : index
      %86 = vector.load %arg8[%c0_44, %c0_45] : memref<1x32xf32, #tpu.memory_space<vmem>>, vector<1x32xf32>
      %87 = vector.broadcast %86 : vector<1x32xf32> to vector<8x32xf32>
      %88 = arith.addf %85, %87 : vector<8x32xf32>
      %c0_46 = arith.constant 0 : index
      %c0_47 = arith.constant 0 : index
      %89 = vector.load %arg9[%c0_46, %c0_47] : memref<32x32xf32, #tpu.memory_space<vmem>>, vector<32x32xf32>
      %cst_48 = arith.constant dense<0.000000e+00> : vector<8x32xf32>
      %90 = tpu.matmul %83, %89, %cst_48 {dimension_numbers = #tpu.dot_dimension_numbers<[1], [0], [0], [1], [0, 0, 1, 1], [], []>} : vector<8x32xf32>, vector<32x32xf32>, vector<8x32xf32> -> vector<8x32xf32>
      %c0_49 = arith.constant 0 : index
      %c0_50 = arith.constant 0 : index
      %91 = vector.load %arg10[%c0_49, %c0_50] : memref<1x32xf32, #tpu.memory_space<vmem>>, vector<1x32xf32>
      %92 = vector.broadcast %91 : vector<1x32xf32> to vector<8x32xf32>
      %93 = arith.addf %90, %92 : vector<8x32xf32>
      %94 = vector.extract_strided_slice %88 {offsets = [0, 0], sizes = [8, 8], strides = [1, 1]} : vector<8x32xf32> to vector<8x8xf32>
      %95 = vector.extract_strided_slice %88 {offsets = [0, 8], sizes = [8, 8], strides = [1, 1]} : vector<8x32xf32> to vector<8x8xf32>
      %96 = vector.extract_strided_slice %88 {offsets = [0, 16], sizes = [8, 8], strides = [1, 1]} : vector<8x32xf32> to vector<8x8xf32>
      %97 = vector.extract_strided_slice %88 {offsets = [0, 24], sizes = [8, 8], strides = [1, 1]} : vector<8x32xf32> to vector<8x8xf32>
      %98 = vector.shape_cast %94 : vector<8x8xf32> to vector<1x8x8xf32>
      %99 = vector.shape_cast %95 : vector<8x8xf32> to vector<1x8x8xf32>
      %100 = vector.shape_cast %96 : vector<8x8xf32> to vector<1x8x8xf32>
      %101 = vector.shape_cast %97 : vector<8x8xf32> to vector<1x8x8xf32>
      %102 = tpu.concatenate %98, %99, %100, %101 in 0 : vector<1x8x8xf32>, vector<1x8x8xf32>, vector<1x8x8xf32>, vector<1x8x8xf32> -> vector<4x8x8xf32>
      %c0_51 = arith.constant 0 : index
      %c0_52 = arith.constant 0 : index
      %c0_53 = arith.constant 0 : index
      %103 = vector.load %arg16[%c0_51, %c0_52, %c0_53] : memref<4x8x8xf32, #tpu.memory_space<vmem>>, vector<4x8x8xf32>
      tpu.vector_store %arg16[%c0_51, %c0_52, %c0_53], %102 {strides = array<i32>} : memref<4x8x8xf32, #tpu.memory_space<vmem>>, vector<4x8x8xf32>,
      %104 = vector.extract_strided_slice %93 {offsets = [0, 0], sizes = [8, 8], strides = [1, 1]} : vector<8x32xf32> to vector<8x8xf32>
      %105 = vector.extract_strided_slice %93 {offsets = [0, 8], sizes = [8, 8], strides = [1, 1]} : vector<8x32xf32> to vector<8x8xf32>
      %106 = vector.extract_strided_slice %93 {offsets = [0, 16], sizes = [8, 8], strides = [1, 1]} : vector<8x32xf32> to vector<8x8xf32>
      %107 = vector.extract_strided_slice %93 {offsets = [0, 24], sizes = [8, 8], strides = [1, 1]} : vector<8x32xf32> to vector<8x8xf32>
      %108 = vector.shape_cast %104 : vector<8x8xf32> to vector<1x8x8xf32>
      %109 = vector.shape_cast %105 : vector<8x8xf32> to vector<1x8x8xf32>
      %110 = vector.shape_cast %106 : vector<8x8xf32> to vector<1x8x8xf32>
      %111 = vector.shape_cast %107 : vector<8x8xf32> to vector<1x8x8xf32>
      %112 = tpu.concatenate %108, %109, %110, %111 in 0 : vector<1x8x8xf32>, vector<1x8x8xf32>, vector<1x8x8xf32>, vector<1x8x8xf32> -> vector<4x8x8xf32>
      %c0_54 = arith.constant 0 : index
      %c0_55 = arith.constant 0 : index
      %c0_56 = arith.constant 0 : index
      %113 = vector.load %arg17[%c0_54, %c0_55, %c0_56] : memref<4x8x8xf32, #tpu.memory_space<vmem>>, vector<4x8x8xf32>
      tpu.vector_store %arg17[%c0_54, %c0_55, %c0_56], %112 {strides = array<i32>} : memref<4x8x8xf32, #tpu.memory_space<vmem>>, vector<4x8x8xf32>,
    } else {
    }
    %c0_3 = arith.constant 0 : index
    %c0_4 = arith.constant 0 : index
    %5 = vector.load %arg5[%c0_3, %c0_4] : memref<32x32xf32, #tpu.memory_space<vmem>>, vector<32x32xf32>
    %cst = arith.constant dense<0.000000e+00> : vector<8x32xf32>
    %6 = tpu.matmul %1, %5, %cst {dimension_numbers = #tpu.dot_dimension_numbers<[1], [0], [0], [1], [0, 0, 1, 1], [], []>} : vector<8x32xf32>, vector<32x32xf32>, vector<8x32xf32> -> vector<8x32xf32>
    %c0_5 = arith.constant 0 : index
    %c0_6 = arith.constant 0 : index
    %7 = vector.load %arg6[%c0_5, %c0_6] : memref<1x32xf32, #tpu.memory_space<vmem>>, vector<1x32xf32>
    %8 = vector.broadcast %7 : vector<1x32xf32> to vector<8x32xf32>
    %9 = arith.addf %6, %8 : vector<8x32xf32>
    %cst_7 = arith.constant 0.353553385 : f32
    %10 = vector.broadcast %cst_7 : f32 to vector<8x32xf32>
    %11 = arith.mulf %9, %10 : vector<8x32xf32>
    %12 = vector.extract_strided_slice %11 {offsets = [0, 0], sizes = [8, 8], strides = [1, 1]} : vector<8x32xf32> to vector<8x8xf32>
    %13 = vector.extract_strided_slice %11 {offsets = [0, 8], sizes = [8, 8], strides = [1, 1]} : vector<8x32xf32> to vector<8x8xf32>
    %14 = vector.extract_strided_slice %11 {offsets = [0, 16], sizes = [8, 8], strides = [1, 1]} : vector<8x32xf32> to vector<8x8xf32>
    %15 = vector.extract_strided_slice %11 {offsets = [0, 24], sizes = [8, 8], strides = [1, 1]} : vector<8x32xf32> to vector<8x8xf32>
    %16 = vector.shape_cast %12 : vector<8x8xf32> to vector<1x8x8xf32>
    %17 = vector.shape_cast %13 : vector<8x8xf32> to vector<1x8x8xf32>
    %18 = vector.shape_cast %14 : vector<8x8xf32> to vector<1x8x8xf32>
    %19 = vector.shape_cast %15 : vector<8x8xf32> to vector<1x8x8xf32>
    %20 = tpu.concatenate %16, %17, %18, %19 in 0 : vector<1x8x8xf32>, vector<1x8x8xf32>, vector<1x8x8xf32>, vector<1x8x8xf32> -> vector<4x8x8xf32>
    %c0_8 = arith.constant 0 : index
    %c0_9 = arith.constant 0 : index
    %c0_10 = arith.constant 0 : index
    %21 = vector.load %arg16[%c0_8, %c0_9, %c0_10] : memref<4x8x8xf32, #tpu.memory_space<vmem>>, vector<4x8x8xf32>
    "tpu.trace_start"() <{level = 10 : i32, message = "hqd,hkd->hqk"}> : () -> ()
    %cst_11 = arith.constant dense<0.000000e+00> : vector<4x8x8xf32>
    %22 = tpu.matmul %20, %21, %cst_11 {dimension_numbers = #tpu.dot_dimension_numbers<[2], [2], [1], [1], [0, 0, 0, 1, 1, 1], [0], [0]>} : vector<4x8x8xf32>, vector<4x8x8xf32>, vector<4x8x8xf32> -> vector<4x8x8xf32>
    "tpu.trace_stop"() : () -> ()
    %c0_12 = arith.constant 0 : index
    %c0_13 = arith.constant 0 : index
    %c0_14 = arith.constant 0 : index
    %23 = vector.load %arg4[%c0_12, %c0_13, %c0_14] : memref<1x1x8xf32, #tpu.memory_space<vmem>>, vector<1x1x8xf32>
    %24 = vector.shape_cast %23 : vector<1x1x8xf32> to vector<1x8xf32>
    %25 = vector.shape_cast %24 : vector<1x8xf32> to vector<1x1x8xf32>
    %26 = vector.broadcast %25 : vector<1x1x8xf32> to vector<4x8x8xf32>
    %27 = arith.addf %22, %26 : vector<4x8x8xf32>
    %cst_15 = arith.constant dense<0xFF800000> : vector<4x8xf32>
    %28 = vector.multi_reduction <maximumf>, %27, %cst_15 [2] : vector<4x8x8xf32> to vector<4x8xf32>
    %29 = vector.shape_cast %28 : vector<4x8xf32> to vector<4x8x1xf32>
    %30 = vector.broadcast %29 : vector<4x8x1xf32> to vector<4x8x8xf32>
    %31 = arith.subf %27, %30 : vector<4x8x8xf32>
    %32 = math.exp %31 : vector<4x8x8xf32>
    %cst_16 = arith.constant dense<0.000000e+00> : vector<4x8xf32>
    %33 = vector.multi_reduction <add>, %32, %cst_16 [2] : vector<4x8x8xf32> to vector<4x8xf32>
    %34 = vector.shape_cast %33 : vector<4x8xf32> to vector<4x8x1xf32>
    %35 = tpu.reciprocal %34 {approx = true} : vector<4x8x1xf32> -> vector<4x8x1xf32>
    %36 = vector.broadcast %35 : vector<4x8x1xf32> to vector<4x8x8xf32>
    %37 = arith.mulf %32, %36 : vector<4x8x8xf32>
    %c0_17 = arith.constant 0 : index
    %c0_18 = arith.constant 0 : index
    %c0_19 = arith.constant 0 : index
    %38 = vector.load %arg17[%c0_17, %c0_18, %c0_19] : memref<4x8x8xf32, #tpu.memory_space<vmem>>, vector<4x8x8xf32>
    "tpu.trace_start"() <{level = 10 : i32, message = "hqk,hkd->hqd"}> : () -> ()
    %cst_20 = arith.constant dense<0.000000e+00> : vector<4x8x8xf32>
    %39 = tpu.matmul %37, %38, %cst_20 {dimension_numbers = #tpu.dot_dimension_numbers<[2], [1], [1], [2], [0, 0, 0, 1, 1, 2], [0], [0]>} : vector<4x8x8xf32>, vector<4x8x8xf32>, vector<4x8x8xf32> -> vector<4x8x8xf32>
    "tpu.trace_stop"() : () -> ()
    %40 = vector.extract_strided_slice %39 {offsets = [0, 0, 0], sizes = [1, 8, 8], strides = [1, 1, 1]} : vector<4x8x8xf32> to vector<1x8x8xf32>
    %41 = vector.shape_cast %40 : vector<1x8x8xf32> to vector<8x8xf32>
    %42 = vector.extract_strided_slice %39 {offsets = [1, 0, 0], sizes = [1, 8, 8], strides = [1, 1, 1]} : vector<4x8x8xf32> to vector<1x8x8xf32>
    %43 = vector.shape_cast %42 : vector<1x8x8xf32> to vector<8x8xf32>
    %44 = vector.extract_strided_slice %39 {offsets = [2, 0, 0], sizes = [1, 8, 8], strides = [1, 1, 1]} : vector<4x8x8xf32> to vector<1x8x8xf32>
    %45 = vector.shape_cast %44 : vector<1x8x8xf32> to vector<8x8xf32>
    %46 = vector.extract_strided_slice %39 {offsets = [3, 0, 0], sizes = [1, 8, 8], strides = [1, 1, 1]} : vector<4x8x8xf32> to vector<1x8x8xf32>
    %47 = vector.shape_cast %46 : vector<1x8x8xf32> to vector<8x8xf32>
    %48 = tpu.concatenate %41, %43, %45, %47 in 1 : vector<8x8xf32>, vector<8x8xf32>, vector<8x8xf32>, vector<8x8xf32> -> vector<8x32xf32>
    %c0_21 = arith.constant 0 : index
    %c0_22 = arith.constant 0 : index
    %49 = vector.load %arg11[%c0_21, %c0_22] : memref<32x32xf32, #tpu.memory_space<vmem>>, vector<32x32xf32>
    %cst_23 = arith.constant dense<0.000000e+00> : vector<8x32xf32>
    %50 = tpu.matmul %48, %49, %cst_23 {dimension_numbers = #tpu.dot_dimension_numbers<[1], [0], [0], [1], [0, 0, 1, 1], [], []>} : vector<8x32xf32>, vector<32x32xf32>, vector<8x32xf32> -> vector<8x32xf32>
    %c0_24 = arith.constant 0 : index
    %c0_25 = arith.constant 0 : index
    %51 = vector.load %arg12[%c0_24, %c0_25] : memref<1x32xf32, #tpu.memory_space<vmem>>, vector<1x32xf32>
    %52 = vector.broadcast %51 : vector<1x32xf32> to vector<8x32xf32>
    %53 = arith.addf %50, %52 : vector<8x32xf32>
    %54 = arith.addf %1, %53 : vector<8x32xf32>
    %cst_26 = arith.constant dense<0.000000e+00> : vector<8xf32>
    %55 = vector.multi_reduction <add>, %54, %cst_26 [1] : vector<8x32xf32> to vector<8xf32>
    %56 = vector.shape_cast %55 : vector<8xf32> to vector<8x1xf32>
    %cst_27 = arith.constant 3.200000e+01 : f32
    %57 = vector.broadcast %cst_27 : f32 to vector<8x1xf32>
    %58 = arith.divf %56, %57 : vector<8x1xf32>
    %59 = vector.broadcast %58 : vector<8x1xf32> to vector<8x32xf32>
    %60 = arith.subf %54, %59 : vector<8x32xf32>
    %61 = arith.mulf %60, %60 : vector<8x32xf32>
    %cst_28 = arith.constant dense<0.000000e+00> : vector<8xf32>
    %62 = vector.multi_reduction <add>, %61, %cst_28 [1] : vector<8x32xf32> to vector<8xf32>
    %63 = vector.shape_cast %62 : vector<8xf32> to vector<8x1xf32>
    %cst_29 = arith.constant 3.200000e+01 : f32
    %64 = vector.broadcast %cst_29 : f32 to vector<8x1xf32>
    %65 = arith.divf %63, %64 : vector<8x1xf32>
    %66 = vector.broadcast %58 : vector<8x1xf32> to vector<8x32xf32>
    %67 = arith.subf %54, %66 : vector<8x32xf32>
    %cst_30 = arith.constant 9.99999996E-13 : f32
    %68 = vector.broadcast %cst_30 : f32 to vector<8x1xf32>
    %69 = arith.addf %65, %68 : vector<8x1xf32>
    %70 = math.rsqrt %69 : vector<8x1xf32>
    %71 = vector.broadcast %70 : vector<8x1xf32> to vector<8x32xf32>
    %72 = arith.mulf %67, %71 : vector<8x32xf32>
    %c0_31 = arith.constant 0 : index
    %c0_32 = arith.constant 0 : index
    %73 = vector.load %arg13[%c0_31, %c0_32] : memref<1x32xf32, #tpu.memory_space<vmem>>, vector<1x32xf32>
    %74 = vector.broadcast %73 : vector<1x32xf32> to vector<8x32xf32>
    %75 = arith.mulf %72, %74 : vector<8x32xf32>
    %c0_33 = arith.constant 0 : index
    %c0_34 = arith.constant 0 : index
    %76 = vector.load %arg14[%c0_33, %c0_34] : memref<1x32xf32, #tpu.memory_space<vmem>>, vector<1x32xf32>
    %77 = vector.broadcast %76 : vector<1x32xf32> to vector<8x32xf32>
    %78 = arith.addf %75, %77 : vector<8x32xf32>
    %c0_35 = arith.constant 0 : index
    %c0_36 = arith.constant 0 : index
    %c0_37 = arith.constant 0 : index
    %79 = vector.load %arg15[%c0_35, %c0_36, %c0_37] : memref<1x8x32xf32, #tpu.memory_space<vmem>>, vector<1x8x32xf32>
    %80 = vector.shape_cast %79 : vector<1x8x32xf32> to vector<8x32xf32>
    %81 = vector.shape_cast %78 : vector<8x32xf32> to vector<1x8x32xf32>
    tpu.vector_store %arg15[%c0_35, %c0_36, %c0_37], %81 {strides = array<i32>} : memref<1x8x32xf32, #tpu.memory_space<vmem>>, vector<1x8x32xf32>,
    return
  }
  func.func @transform_0(%arg0: i32, %arg1: i32) -> (i32, i32, i32) {
    %c0_i32 = arith.constant 0 : i32
    %c0_i32_0 = arith.constant 0 : i32
    return %arg0, %arg1, %c0_i32 : i32, i32, i32
  }
  func.func @transform_1(%arg0: i32, %arg1: i32) -> (i32, i32, i32) {
    %c0_i32 = arith.constant 0 : i32
    %c0_i32_0 = arith.constant 0 : i32
    %c0_i32_1 = arith.constant 0 : i32
    return %arg0, %c0_i32, %c0_i32_0 : i32, i32, i32
  }
  func.func @transform_2(%arg0: i32, %arg1: i32) -> (i32, i32, i32) {
    %c0_i32 = arith.constant 0 : i32
    %c0_i32_0 = arith.constant 0 : i32
    %c0_i32_1 = arith.constant 0 : i32
    return %arg0, %c0_i32, %c0_i32_0 : i32, i32, i32
  }
  func.func @transform_3(%arg0: i32, %arg1: i32) -> (i32, i32) {
    %c0_i32 = arith.constant 0 : i32
    %c0_i32_0 = arith.constant 0 : i32
    %c0_i32_1 = arith.constant 0 : i32
    return %c0_i32, %c0_i32_0 : i32, i32
  }
  func.func @transform_4(%arg0: i32, %arg1: i32) -> (i32, i32) {
    %c0_i32 = arith.constant 0 : i32
    %c0_i32_0 = arith.constant 0 : i32
    %c0_i32_1 = arith.constant 0 : i32
    return %c0_i32, %c0_i32_0 : i32, i32
  }
  func.func @transform_5(%arg0: i32, %arg1: i32) -> (i32, i32) {
    %c0_i32 = arith.constant 0 : i32
    %c0_i32_0 = arith.constant 0 : i32
    %c0_i32_1 = arith.constant 0 : i32
    return %c0_i32, %c0_i32_0 : i32, i32
  }
  func.func @transform_6(%arg0: i32, %arg1: i32) -> (i32, i32) {
    %c0_i32 = arith.constant 0 : i32
    %c0_i32_0 = arith.constant 0 : i32
    %c0_i32_1 = arith.constant 0 : i32
    return %c0_i32, %c0_i32_0 : i32, i32
  }
  func.func @transform_7(%arg0: i32, %arg1: i32) -> (i32, i32) {
    %c0_i32 = arith.constant 0 : i32
    %c0_i32_0 = arith.constant 0 : i32
    %c0_i32_1 = arith.constant 0 : i32
    return %c0_i32, %c0_i32_0 : i32, i32
  }
  func.func @transform_8(%arg0: i32, %arg1: i32) -> (i32, i32) {
    %c0_i32 = arith.constant 0 : i32
    %c0_i32_0 = arith.constant 0 : i32
    %c0_i32_1 = arith.constant 0 : i32
    return %c0_i32, %c0_i32_0 : i32, i32
  }
  func.func @transform_9(%arg0: i32, %arg1: i32) -> (i32, i32) {
    %c0_i32 = arith.constant 0 : i32
    %c0_i32_0 = arith.constant 0 : i32
    %c0_i32_1 = arith.constant 0 : i32
    return %c0_i32, %c0_i32_0 : i32, i32
  }
  func.func @transform_10(%arg0: i32, %arg1: i32) -> (i32, i32) {
    %c0_i32 = arith.constant 0 : i32
    %c0_i32_0 = arith.constant 0 : i32
    %c0_i32_1 = arith.constant 0 : i32
    return %c0_i32, %c0_i32_0 : i32, i32
  }
  func.func @transform_11(%arg0: i32, %arg1: i32) -> (i32, i32) {
    %c0_i32 = arith.constant 0 : i32
    %c0_i32_0 = arith.constant 0 : i32
    %c0_i32_1 = arith.constant 0 : i32
    return %c0_i32, %c0_i32_0 : i32, i32
  }
  func.func @transform_12(%arg0: i32, %arg1: i32) -> (i32, i32) {
    %c0_i32 = arith.constant 0 : i32
    %c0_i32_0 = arith.constant 0 : i32
    %c0_i32_1 = arith.constant 0 : i32
    return %c0_i32, %c0_i32_0 : i32, i32
  }
  func.func @transform_13(%arg0: i32, %arg1: i32) -> (i32, i32, i32) {
    %c0_i32 = arith.constant 0 : i32
    %c0_i32_0 = arith.constant 0 : i32
    return %arg0, %arg1, %c0_i32 : i32, i32, i32
  }
}

</mosaic_0001>

<llo_original>
// kernel: tpu_custom_call.1
$region0: #{tpu_custom_call.1}
  #allocation0 [shape = 'u32[]', space=smem, size = 0x4, offset = 0x4, fixed_abs, tag = 'smem constant byte address 0x4 - core index']
  #allocation1 [shape = 'u32[144,128]{1,0:T(1,128)}', space=vmem, size = 0x12000, scoped, tag = 'internal scratch']
  #allocation2 [shape = 'f32[4,8,8]{2,1,0:T(8,128)}', space=vmem, size = 0x4000, scoped, tag = 'scratch operand']
  #allocation3 [shape = 'f32[4,8,8]{2,1,0:T(8,128)}', space=vmem, size = 0x4000, scoped, tag = 'scratch operand']
  %s0 = inlined_call_operand.hbm [shape: f32[2,8,32], index: 0, kind: input, shape index: {}]
  %s1 = inlined_call_operand.hbm [shape: f32[2,8,32], index: 1, kind: input, shape index: {}]
  %s2 = inlined_call_operand.vmem [shape: f32[2,1,8], index: 2, kind: input, shape index: {}]
  %s3 = inlined_call_operand.hbm [shape: f32[32,32], index: 3, kind: input, shape index: {}]
  %s4 = inlined_call_operand.vmem [shape: f32[1,32], index: 4, kind: input, shape index: {}]
  %s5 = inlined_call_operand.hbm [shape: f32[32,32], index: 5, kind: input, shape index: {}]
  %s6 = inlined_call_operand.vmem [shape: f32[1,32], index: 6, kind: input, shape index: {}]
  %s7 = inlined_call_operand.hbm [shape: f32[32,32], index: 7, kind: input, shape index: {}]
  %s8 = inlined_call_operand.vmem [shape: f32[1,32], index: 8, kind: input, shape index: {}]
  %s9 = inlined_call_operand.hbm [shape: f32[32,32], index: 9, kind: input, shape index: {}]
  %s10 = inlined_call_operand.vmem [shape: f32[1,32], index: 10, kind: input, shape index: {}]
  %s11 = inlined_call_operand.vmem [shape: f32[1,32], index: 11, kind: input, shape index: {}]
  %s12 = inlined_call_operand.vmem [shape: f32[1,32], index: 12, kind: input, shape index: {}]
  %s13 = inlined_call_operand.hbm [shape: f32[2,8,32], index: 13, kind: output, shape index: {}]
  %s14 = sld [smem:[#allocation0]]
  $region113: #{tpu_custom_call.1} parent=0
    _
  %s16 = ssub.s32 1, %s14
  %s17 = scalar_select 0, %s16, %s14
  $region1: #{tpu_custom_call.1} parent=0
    #allocation4 [shape = 'u8[8192]{0}', space=vmem, size = 0x2000, scoped, tag = 'input window, operand 0']
    #allocation5 [shape = 's32[2]{0}', space=sflag, size = 0x8, scoped, tag = 'scoped memory for tpu_custom_call.1']
    #allocation6 [shape = 's32[2]{0}', space=sflag, size = 0x8, scoped, tag = 'scoped memory for tpu_custom_call.1']
    #allocation7 [shape = 'u8[8192]{0}', space=vmem, size = 0x2000, scoped, tag = 'input window, operand 1']
    #allocation8 [shape = 's32[2]{0}', space=sflag, size = 0x8, scoped, tag = 'scoped memory for tpu_custom_call.1']
    #allocation9 [shape = 'u8[16384]{0}', space=vmem, size = 0x4000, scoped, tag = 'input window, operand 3, single buffered']
    #allocation10 [shape = 'u8[16384]{0}', space=vmem, size = 0x4000, scoped, tag = 'input window, operand 5, single buffered']
    #allocation11 [shape = 's32[1]{0}', space=sflag, size = 0x4, scoped, tag = 'scoped memory for tpu_custom_call.1']
    #allocation12 [shape = 'u8[16384]{0}', space=vmem, size = 0x4000, scoped, tag = 'input window, operand 7, single buffered']
    #allocation13 [shape = 'u8[16384]{0}', space=vmem, size = 0x4000, scoped, tag = 'input window, operand 9, single buffered']
    #allocation14 [shape = 's32[1]{0}', space=sflag, size = 0x4, scoped, tag = 'scoped memory for tpu_custom_call.1']
    #allocation15 [shape = 'u8[8192]{0}', space=vmem, size = 0x2000, scoped, tag = 'output window, operand 0']
    %18 = vsyncpa [#allocation5], 0
    %s19 = scalar_lea.sflag [#allocation5], 1
    %20 = vsyncpa %s19, 0
    %21 = vsyncpa [#allocation8], 0
    %s22 = scalar_lea.sflag [#allocation8], 1
    %23 = vsyncpa %s22, 0
    %24 = vsyncpa [#allocation11], 0
    %25 = vsyncpa [#allocation14], 0
    %26 = vsyncpa [#allocation6], 0
    %s27 = scalar_lea.sflag [#allocation6], 1
    %28 = vsyncpa %s27, 0
    loop: start=0, step=1, limit=4
    $region2: #{tpu_custom_call.1} parent=1 // loop_pre_header
      _
    $region3: #{tpu_custom_call.1} parent=1 // loop_header
      %s30 = sphi 0, %s34
      %p31 = scmp.ge.s32.totalorder %s30, 4
      %s37 = sphi 0, %s49
      %s38 = sphi 0, %s45
      %s39 = sphi 0, %s37
      %s40 = sphi 0, %s38
      %s41 = sphi 0, %s39
      %s42 = sphi 0, %s40
      %s54 = sphi 0, %s56
      %s57 = sphi 0, %s54
      %s58 = sphi 0, %s57
      %s74 = sphi 0, %s58
      %s80 = sphi 0, %s82
      %s83 = sphi 0, %s80
      %s84 = sphi 0, %s83
      %s100 = sphi 0, %s84
      %s106 = sphi 0, %s108
      %s109 = sphi 0, %s106
      %s110 = sphi 0, %s109
      %s126 = sphi 0, %s110
      %s130 = sphi 0, %s130
      %s132 = sphi 0, %s130
      %s133 = sphi 0, %s132
      %s147 = sphi 0, %s133
      %s151 = sphi 0, %s151
      %s153 = sphi 0, %s151
      %s154 = sphi 0, %s153
      %s168 = sphi 0, %s154
      %s172 = sphi 0, %s172
      %s174 = sphi 0, %s172
      %s175 = sphi 0, %s174
      %s189 = sphi 0, %s175
      %s193 = sphi 0, %s193
      %s195 = sphi 0, %s193
      %s196 = sphi 0, %s195
      %s210 = sphi 0, %s196
      %s214 = sphi 0, %s214
      %s216 = sphi 0, %s214
      %s217 = sphi 0, %s216
      %s231 = sphi 0, %s217
      %s235 = sphi 0, %s235
      %s237 = sphi 0, %s235
      %s238 = sphi 0, %s237
      %s252 = sphi 0, %s238
      %s256 = sphi 0, %s256
      %s258 = sphi 0, %s256
      %s259 = sphi 0, %s258
      %s273 = sphi 0, %s259
      %s277 = sphi 0, %s277
      %s279 = sphi 0, %s277
      %s280 = sphi 0, %s279
      %s294 = sphi 0, %s280
      %s298 = sphi 0, %s298
      %s300 = sphi 0, %s298
      %s301 = sphi 0, %s300
      %s315 = sphi 0, %s301
      %s319 = sphi 0, %s319
      %s321 = sphi 0, %s319
      %s322 = sphi 0, %s321
      %s336 = sphi 0, %s322
      %s344 = sphi 0, %s346
      %s347 = sphi 0, %s344
      %s348 = sphi 0, %s347
      %s364 = sphi 0, %s348
    $region4: #{tpu_custom_call.1} parent=1 // loop_header_branch
      %33 = sbr.rel (%p31) target = $region8
    $region5: #{tpu_custom_call.1} parent=1 // loop_body
      %s35 = ssub.s32 %s30, 1
      %s36 = ssub.s32 %s30, 2
      %s43 = sadd.s32 1, %s38
      %p44 = scmp.ge.s32.totalorder %s43, 1
      %s45 = scalar_select %p44, 0, %s43
      %s46 = sadd.s32 1, %s37
      %s47 = scalar_select %p44, %s46, %s37
      %p48 = scmp.ge.s32.totalorder %s47, 2
      %s49 = scalar_select %p48, 0, %s47
      %s50 = ssub.s32 %s37, %s49
      %s51 = ssub.s32 %s38, %s45
      %s52 = sor.u32 %s50, %s51
      %p53 = scmp.eq.s32.totalorder %s52, 0
      %s55 = sadd.s32 %s54, 1
      %s56 = scalar_select %p53, %s54, %s55
      %p59 = pneg %p53
      %p60 = scmp.eq.s32.totalorder %s30, 1
      %p61 = por %p59, %p60
      %p62 = scmp.ne.s32.totalorder %s54, %s57
      %p63 = scmp.eq.s32.totalorder %s30, 0
      %p64 = por %p62, %p63
      %p65 = scmp.ne.s32.totalorder %s54, %s57
      %p66 = scmp.eq.s32.totalorder %s35, 1
      %p67 = por %p65, %p66
      %p68 = scmp.ne.s32.totalorder %s57, %s58
      %p69 = scmp.eq.s32.totalorder %s35, 0
      %p70 = por %p68, %p69
      %p71 = scmp.ne.s32.totalorder %s57, %s58
      %p72 = scmp.eq.s32.totalorder %s36, 1
      %p73 = por %p71, %p72
      %p75 = scmp.ne.s32.totalorder %s58, %s74
      %p76 = scmp.eq.s32.totalorder %s36, 0
      %p77 = por %p75, %p76
      %s78 = ssub.s32 %s37, %s49
      %p79 = scmp.eq.s32.totalorder %s78, 0
      %s81 = sadd.s32 %s80, 1
      %s82 = scalar_select %p79, %s80, %s81
      %p85 = pneg %p79
      %p86 = scmp.eq.s32.totalorder %s30, 1
      %p87 = por %p85, %p86
      %p88 = scmp.ne.s32.totalorder %s80, %s83
      %p89 = scmp.eq.s32.totalorder %s30, 0
      %p90 = por %p88, %p89
      %p91 = scmp.ne.s32.totalorder %s80, %s83
      %p92 = scmp.eq.s32.totalorder %s35, 1
      %p93 = por %p91, %p92
      %p94 = scmp.ne.s32.totalorder %s83, %s84
      %p95 = scmp.eq.s32.totalorder %s35, 0
      %p96 = por %p94, %p95
      %p97 = scmp.ne.s32.totalorder %s83, %s84
      %p98 = scmp.eq.s32.totalorder %s36, 1
      %p99 = por %p97, %p98
      %p101 = scmp.ne.s32.totalorder %s84, %s100
      %p102 = scmp.eq.s32.totalorder %s36, 0
      %p103 = por %p101, %p102
      %s104 = ssub.s32 %s37, %s49
      %p105 = scmp.eq.s32.totalorder %s104, 0
      %s107 = sadd.s32 %s106, 1
      %s108 = scalar_select %p105, %s106, %s107
      %p111 = pneg %p105
      %p112 = scmp.eq.s32.totalorder %s30, 1
      %p113 = por %p111, %p112
      %p114 = scmp.ne.s32.totalorder %s106, %s109
      %p115 = scmp.eq.s32.totalorder %s30, 0
      %p116 = por %p114, %p115
      %p117 = scmp.ne.s32.totalorder %s106, %s109
      %p118 = scmp.eq.s32.totalorder %s35, 1
      %p119 = por %p117, %p118
      %p120 = scmp.ne.s32.totalorder %s109, %s110
      %p121 = scmp.eq.s32.totalorder %s35, 0
      %p122 = por %p120, %p121
      %p123 = scmp.ne.s32.totalorder %s109, %s110
      %p124 = scmp.eq.s32.totalorder %s36, 1
      %p125 = por %p123, %p124
      %p127 = scmp.ne.s32.totalorder %s110, %s126
      %p128 = scmp.eq.s32.totalorder %s36, 0
      %p129 = por %p127, %p128
      %s131 = sadd.s32 %s130, 1
      %p134 = scmp.eq.s32.totalorder %s30, 1
      %p135 = scmp.ne.s32.totalorder %s130, %s132
      %p136 = scmp.eq.s32.totalorder %s30, 0
      %p137 = por %p135, %p136
      %p138 = scmp.ne.s32.totalorder %s130, %s132
      %p139 = scmp.eq.s32.totalorder %s35, 1
      %p140 = por %p138, %p139
      %p141 = scmp.ne.s32.totalorder %s132, %s133
      %p142 = scmp.eq.s32.totalorder %s35, 0
      %p143 = por %p141, %p142
      %p144 = scmp.ne.s32.totalorder %s132, %s133
      %p145 = scmp.eq.s32.totalorder %s36, 1
      %p146 = por %p144, %p145
      %p148 = scmp.ne.s32.totalorder %s133, %s147
      %p149 = scmp.eq.s32.totalorder %s36, 0
      %p150 = por %p148, %p149
      %s152 = sadd.s32 %s151, 1
      %p155 = scmp.eq.s32.totalorder %s30, 1
      %p156 = scmp.ne.s32.totalorder %s151, %s153
      %p157 = scmp.eq.s32.totalorder %s30, 0
      %p158 = por %p156, %p157
      %p159 = scmp.ne.s32.totalorder %s151, %s153
      %p160 = scmp.eq.s32.totalorder %s35, 1
      %p161 = por %p159, %p160
      %p162 = scmp.ne.s32.totalorder %s153, %s154
      %p163 = scmp.eq.s32.totalorder %s35, 0
      %p164 = por %p162, %p163
      %p165 = scmp.ne.s32.totalorder %s153, %s154
      %p166 = scmp.eq.s32.totalorder %s36, 1
      %p167 = por %p165, %p166
      %p169 = scmp.ne.s32.totalorder %s154, %s168
      %p170 = scmp.eq.s32.totalorder %s36, 0
      %p171 = por %p169, %p170
      %s173 = sadd.s32 %s172, 1
      %p176 = scmp.eq.s32.totalorder %s30, 1
      %p177 = scmp.ne.s32.totalorder %s172, %s174
      %p178 = scmp.eq.s32.totalorder %s30, 0
      %p179 = por %p177, %p178
      %p180 = scmp.ne.s32.totalorder %s172, %s174
      %p181 = scmp.eq.s32.totalorder %s35, 1
      %p182 = por %p180, %p181
      %p183 = scmp.ne.s32.totalorder %s174, %s175
      %p184 = scmp.eq.s32.totalorder %s35, 0
      %p185 = por %p183, %p184
      %p186 = scmp.ne.s32.totalorder %s174, %s175
      %p187 = scmp.eq.s32.totalorder %s36, 1
      %p188 = por %p186, %p187
      %p190 = scmp.ne.s32.totalorder %s175, %s189
      %p191 = scmp.eq.s32.totalorder %s36, 0
      %p192 = por %p190, %p191
      %s194 = sadd.s32 %s193, 1
      %p197 = scmp.eq.s32.totalorder %s30, 1
      %p198 = scmp.ne.s32.totalorder %s193, %s195
      %p199 = scmp.eq.s32.totalorder %s30, 0
      %p200 = por %p198, %p199
      %p201 = scmp.ne.s32.totalorder %s193, %s195
      %p202 = scmp.eq.s32.totalorder %s35, 1
      %p203 = por %p201, %p202
      %p204 = scmp.ne.s32.totalorder %s195, %s196
      %p205 = scmp.eq.s32.totalorder %s35, 0
      %p206 = por %p204, %p205
      %p207 = scmp.ne.s32.totalorder %s195, %s196
      %p208 = scmp.eq.s32.totalorder %s36, 1
      %p209 = por %p207, %p208
      %p211 = scmp.ne.s32.totalorder %s196, %s210
      %p212 = scmp.eq.s32.totalorder %s36, 0
      %p213 = por %p211, %p212
      %s215 = sadd.s32 %s214, 1
      %p218 = scmp.eq.s32.totalorder %s30, 1
      %p219 = scmp.ne.s32.totalorder %s214, %s216
      %p220 = scmp.eq.s32.totalorder %s30, 0
      %p221 = por %p219, %p220
      %p222 = scmp.ne.s32.totalorder %s214, %s216
      %p223 = scmp.eq.s32.totalorder %s35, 1
      %p224 = por %p222, %p223
      %p225 = scmp.ne.s32.totalorder %s216, %s217
      %p226 = scmp.eq.s32.totalorder %s35, 0
      %p227 = por %p225, %p226
      %p228 = scmp.ne.s32.totalorder %s216, %s217
      %p229 = scmp.eq.s32.totalorder %s36, 1
      %p230 = por %p228, %p229
      %p232 = scmp.ne.s32.totalorder %s217, %s231
      %p233 = scmp.eq.s32.totalorder %s36, 0
      %p234 = por %p232, %p233
      %s236 = sadd.s32 %s235, 1
      %p239 = scmp.eq.s32.totalorder %s30, 1
      %p240 = scmp.ne.s32.totalorder %s235, %s237
      %p241 = scmp.eq.s32.totalorder %s30, 0
      %p242 = por %p240, %p241
      %p243 = scmp.ne.s32.totalorder %s235, %s237
      %p244 = scmp.eq.s32.totalorder %s35, 1
      %p245 = por %p243, %p244
      %p246 = scmp.ne.s32.totalorder %s237, %s238
      %p247 = scmp.eq.s32.totalorder %s35, 0
      %p248 = por %p246, %p247
      %p249 = scmp.ne.s32.totalorder %s237, %s238
      %p250 = scmp.eq.s32.totalorder %s36, 1
      %p251 = por %p249, %p250
      %p253 = scmp.ne.s32.totalorder %s238, %s252
      %p254 = scmp.eq.s32.totalorder %s36, 0
      %p255 = por %p253, %p254
      %s257 = sadd.s32 %s256, 1
      %p260 = scmp.eq.s32.totalorder %s30, 1
      %p261 = scmp.ne.s32.totalorder %s256, %s258
      %p262 = scmp.eq.s32.totalorder %s30, 0
      %p263 = por %p261, %p262
      %p264 = scmp.ne.s32.totalorder %s256, %s258
      %p265 = scmp.eq.s32.totalorder %s35, 1
      %p266 = por %p264, %p265
      %p267 = scmp.ne.s32.totalorder %s258, %s259
      %p268 = scmp.eq.s32.totalorder %s35, 0
      %p269 = por %p267, %p268
      %p270 = scmp.ne.s32.totalorder %s258, %s259
      %p271 = scmp.eq.s32.totalorder %s36, 1
      %p272 = por %p270, %p271
      %p274 = scmp.ne.s32.totalorder %s259, %s273
      %p275 = scmp.eq.s32.totalorder %s36, 0
      %p276 = por %p274, %p275
      %s278 = sadd.s32 %s277, 1
      %p281 = scmp.eq.s32.totalorder %s30, 1
      %p282 = scmp.ne.s32.totalorder %s277, %s279
      %p283 = scmp.eq.s32.totalorder %s30, 0
      %p284 = por %p282, %p283
      %p285 = scmp.ne.s32.totalorder %s277, %s279
      %p286 = scmp.eq.s32.totalorder %s35, 1
      %p287 = por %p285, %p286
      %p288 = scmp.ne.s32.totalorder %s279, %s280
      %p289 = scmp.eq.s32.totalorder %s35, 0
      %p290 = por %p288, %p289
      %p291 = scmp.ne.s32.totalorder %s279, %s280
      %p292 = scmp.eq.s32.totalorder %s36, 1
      %p293 = por %p291, %p292
      %p295 = scmp.ne.s32.totalorder %s280, %s294
      %p296 = scmp.eq.s32.totalorder %s36, 0
      %p297 = por %p295, %p296
      %s299 = sadd.s32 %s298, 1
      %p302 = scmp.eq.s32.totalorder %s30, 1
      %p303 = scmp.ne.s32.totalorder %s298, %s300
      %p304 = scmp.eq.s32.totalorder %s30, 0
      %p305 = por %p303, %p304
      %p306 = scmp.ne.s32.totalorder %s298, %s300
      %p307 = scmp.eq.s32.totalorder %s35, 1
      %p308 = por %p306, %p307
      %p309 = scmp.ne.s32.totalorder %s300, %s301
      %p310 = scmp.eq.s32.totalorder %s35, 0
      %p311 = por %p309, %p310
      %p312 = scmp.ne.s32.totalorder %s300, %s301
      %p313 = scmp.eq.s32.totalorder %s36, 1
      %p314 = por %p312, %p313
      %p316 = scmp.ne.s32.totalorder %s301, %s315
      %p317 = scmp.eq.s32.totalorder %s36, 0
      %p318 = por %p316, %p317
      %s320 = sadd.s32 %s319, 1
      %p323 = scmp.eq.s32.totalorder %s30, 1
      %p324 = scmp.ne.s32.totalorder %s319, %s321
      %p325 = scmp.eq.s32.totalorder %s30, 0
      %p326 = por %p324, %p325
      %p327 = scmp.ne.s32.totalorder %s319, %s321
      %p328 = scmp.eq.s32.totalorder %s35, 1
      %p329 = por %p327, %p328
      %p330 = scmp.ne.s32.totalorder %s321, %s322
      %p331 = scmp.eq.s32.totalorder %s35, 0
      %p332 = por %p330, %p331
      %p333 = scmp.ne.s32.totalorder %s321, %s322
      %p334 = scmp.eq.s32.totalorder %s36, 1
      %p335 = por %p333, %p334
      %p337 = scmp.ne.s32.totalorder %s322, %s336
      %p338 = scmp.eq.s32.totalorder %s36, 0
      %p339 = por %p337, %p338
      %s340 = ssub.s32 %s37, %s49
      %s341 = ssub.s32 %s38, %s45
      %s342 = sor.u32 %s340, %s341
      %p343 = scmp.eq.s32.totalorder %s342, 0
      %s345 = sadd.s32 %s344, 1
      %s346 = scalar_select %p343, %s344, %s345
      %p349 = pneg %p343
      %p350 = scmp.eq.s32.totalorder %s30, 1
      %p351 = por %p349, %p350
      %p352 = scmp.ne.s32.totalorder %s344, %s347
      %p353 = scmp.eq.s32.totalorder %s30, 0
      %p354 = por %p352, %p353
      %p355 = scmp.ne.s32.totalorder %s344, %s347
      %p356 = scmp.eq.s32.totalorder %s35, 1
      %p357 = por %p355, %p356
      %p358 = scmp.ne.s32.totalorder %s347, %s348
      %p359 = scmp.eq.s32.totalorder %s35, 0
      %p360 = por %p358, %p359
      %p361 = scmp.ne.s32.totalorder %s347, %s348
      %p362 = scmp.eq.s32.totalorder %s36, 1
      %p363 = por %p361, %p362
      %p365 = scmp.ne.s32.totalorder %s348, %s364
      %p366 = scmp.eq.s32.totalorder %s36, 0
      %p367 = por %p365, %p366
      %p368 = scmp.le.s32.totalorder 1, %s30
      %p369 = scmp.lt.s32.totalorder %s30, 3
      %p370 = pnand %p368, %p369
      %p371 = pneg %p370
      // Predicated region
      $region9: #{tpu_custom_call.1} parent=5 // pred_check
        _
      $region10: #{tpu_custom_call.1} parent=5 // pred_check_branch
        %373 = sbr.rel (%p370) target = $region12
      $region11: #{tpu_custom_call.1} parent=5 // pred_region
        %s374 = ssub.s32 %s30, 1
        // Predicated region
        $region13: #{tpu_custom_call.1} parent=11 // pred_check
          %p375 = pneg %p143
        $region14: #{tpu_custom_call.1} parent=11 // pred_check_branch
          %377 = sbr.rel (%p375) target = $region16
        $region15: #{tpu_custom_call.1} parent=11 // pred_region
          %s379 = ssub.s32 512, 512
          %380 = vsyncadd [#allocation8], %s379
          %s381 = sshll.u32 [#allocation9], 4
          %s382 = int_to_ptr.vmem [resolvable:$true] %s381
          %387 = dma.hbm_to_vmem [thread:$0]  %s3, 512, %s382, [#allocation8], 128, 128, 8
        $region16: #{tpu_custom_call.1} parent=11 // pred_fallthru
          _
        // Predicated region
        $region17: #{tpu_custom_call.1} parent=11 // pred_check
          %p388 = pneg %p164
        $region18: #{tpu_custom_call.1} parent=11 // pred_check_branch
          %390 = sbr.rel (%p388) target = $region20
        $region19: #{tpu_custom_call.1} parent=11 // pred_region
          _
        $region20: #{tpu_custom_call.1} parent=11 // pred_fallthru
          _
        // Predicated region
        $region21: #{tpu_custom_call.1} parent=11 // pred_check
          %p391 = pneg %p185
        $region22: #{tpu_custom_call.1} parent=11 // pred_check_branch
          %393 = sbr.rel (%p391) target = $region24
        $region23: #{tpu_custom_call.1} parent=11 // pred_region
          %s395 = ssub.s32 512, 512
          %396 = vsyncadd [#allocation11], %s395
          %s397 = sshll.u32 [#allocation10], 4
          %s398 = int_to_ptr.vmem [resolvable:$true] %s397
          %403 = dma.hbm_to_vmem [thread:$0]  %s5, 512, %s398, [#allocation11], 128, 128, 8
        $region24: #{tpu_custom_call.1} parent=11 // pred_fallthru
          _
        // Predicated region
        $region25: #{tpu_custom_call.1} parent=11 // pred_check
          %p404 = pneg %p206
        $region26: #{tpu_custom_call.1} parent=11 // pred_check_branch
          %406 = sbr.rel (%p404) target = $region28
        $region27: #{tpu_custom_call.1} parent=11 // pred_region
          _
        $region28: #{tpu_custom_call.1} parent=11 // pred_fallthru
          _
        // Predicated region
        $region29: #{tpu_custom_call.1} parent=11 // pred_check
          %p407 = pneg %p227
        $region30: #{tpu_custom_call.1} parent=11 // pred_check_branch
          %409 = sbr.rel (%p407) target = $region32
        $region31: #{tpu_custom_call.1} parent=11 // pred_region
          %s411 = ssub.s32 512, 512
          %412 = vsyncadd [#allocation11], %s411
          %s413 = sshll.u32 [#allocation12], 4
          %s414 = int_to_ptr.vmem [resolvable:$true] %s413
          %419 = dma.hbm_to_vmem [thread:$0]  %s7, 512, %s414, [#allocation11], 128, 128, 8
        $region32: #{tpu_custom_call.1} parent=11 // pred_fallthru
          _
        // Predicated region
        $region33: #{tpu_custom_call.1} parent=11 // pred_check
          %p420 = pneg %p248
        $region34: #{tpu_custom_call.1} parent=11 // pred_check_branch
          %422 = sbr.rel (%p420) target = $region36
        $region35: #{tpu_custom_call.1} parent=11 // pred_region
          _
        $region36: #{tpu_custom_call.1} parent=11 // pred_fallthru
          _
        // Predicated region
        $region37: #{tpu_custom_call.1} parent=11 // pred_check
          %p423 = pneg %p269
        $region38: #{tpu_custom_call.1} parent=11 // pred_check_branch
          %425 = sbr.rel (%p423) target = $region40
        $region39: #{tpu_custom_call.1} parent=11 // pred_region
          %s427 = ssub.s32 512, 512
          %428 = vsyncadd [#allocation14], %s427
          %s429 = sshll.u32 [#allocation13], 4
          %s430 = int_to_ptr.vmem [resolvable:$true] %s429
          %435 = dma.hbm_to_vmem [thread:$0]  %s9, 512, %s430, [#allocation14], 128, 128, 8
        $region40: #{tpu_custom_call.1} parent=11 // pred_fallthru
          _
        // Predicated region
        $region41: #{tpu_custom_call.1} parent=11 // pred_check
          %p436 = pneg %p290
        $region42: #{tpu_custom_call.1} parent=11 // pred_check_branch
          %438 = sbr.rel (%p436) target = $region44
        $region43: #{tpu_custom_call.1} parent=11 // pred_region
          _
        $region44: #{tpu_custom_call.1} parent=11 // pred_fallthru
          _
        // Predicated region
        $region45: #{tpu_custom_call.1} parent=11 // pred_check
          %p439 = pneg %p311
        $region46: #{tpu_custom_call.1} parent=11 // pred_check_branch
          %441 = sbr.rel (%p439) target = $region48
        $region47: #{tpu_custom_call.1} parent=11 // pred_region
          _
        $region48: #{tpu_custom_call.1} parent=11 // pred_fallthru
          _
        // Predicated region
        $region49: #{tpu_custom_call.1} parent=11 // pred_check
          %p442 = pneg %p332
        $region50: #{tpu_custom_call.1} parent=11 // pred_check_branch
          %444 = sbr.rel (%p442) target = $region52
        $region51: #{tpu_custom_call.1} parent=11 // pred_region
          _
        $region52: #{tpu_custom_call.1} parent=11 // pred_fallthru
          _
      $region12: #{tpu_custom_call.1} parent=5 // pred_fallthru
        _
      %p445 = scmp.lt.s32.totalorder %s30, 2
      // Predicated region
      $region53: #{tpu_custom_call.1} parent=5 // pred_check
        %p446 = pneg %p445
      $region54: #{tpu_custom_call.1} parent=5 // pred_check_branch
        %448 = sbr.rel (%p446) target = $region56
      $region55: #{tpu_custom_call.1} parent=5 // pred_region
        // Predicated region
        $region57: #{tpu_custom_call.1} parent=55 // pred_check
          %p449 = pneg %p64
        $region58: #{tpu_custom_call.1} parent=55 // pred_check_branch
          %451 = sbr.rel (%p449) target = $region60
        $region59: #{tpu_custom_call.1} parent=55 // pred_region
          %s452 = sand.u32 %s54, 1
          %s453 = scalar_lea.sflag [#allocation5], %s452
          %s454 = sand.u32 %s54, 1
          %s455 = smul.addr %s454, 8
          %s456 = scalar_lea.vmem [#allocation4], %s455
          %s458 = ssub.s32 128, 128
          %459 = vsyncadd %s453, %s458
          %s460 = sadd.s32 %s38, %s37
          %s461 = smul.addr %s460, 128
          %s462 = scalar_lea.hbm %s0, %s461
          %s464 = sshll.u32 %s456, 4
          %s465 = int_to_ptr.vmem [resolvable:$true] %s464
          %467 = dma.hbm_to_vmem [thread:$0]  %s462, 128, %s465, %s453
        $region60: #{tpu_custom_call.1} parent=55 // pred_fallthru
          _
        // Predicated region
        $region61: #{tpu_custom_call.1} parent=55 // pred_check
          %p468 = pneg %p90
        $region62: #{tpu_custom_call.1} parent=55 // pred_check_branch
          %470 = sbr.rel (%p468) target = $region64
        $region63: #{tpu_custom_call.1} parent=55 // pred_region
          %s471 = sand.u32 %s30, 1
          %s472 = scalar_lea.sflag [#allocation8], %s471
          %s473 = sand.u32 %s80, 1
          %s474 = smul.addr %s473, 8
          %s475 = scalar_lea.vmem [#allocation7], %s474
          %s477 = ssub.s32 128, 128
          %478 = vsyncadd %s472, %s477
          %s479 = smul.addr %s37, 128
          %s480 = scalar_lea.hbm %s1, %s479
          %s482 = sshll.u32 %s475, 4
          %s483 = int_to_ptr.vmem [resolvable:$true] %s482
          %485 = dma.hbm_to_vmem [thread:$0]  %s480, 128, %s483, %s472
        $region64: #{tpu_custom_call.1} parent=55 // pred_fallthru
          _
        // Predicated region
        $region65: #{tpu_custom_call.1} parent=55 // pred_check
          %p486 = pneg %p116
        $region66: #{tpu_custom_call.1} parent=55 // pred_check_branch
          %488 = sbr.rel (%p486) target = $region68
        $region67: #{tpu_custom_call.1} parent=55 // pred_region
          %p489 = scmp.lt.s32.totalorder %s37, 1
          %s490 = scalar_select %p489, %s37, 1
          %s491 = scalar_lea.vmem %s2, %s490
        $region68: #{tpu_custom_call.1} parent=55 // pred_fallthru
          _
      $region56: #{tpu_custom_call.1} parent=5 // pred_fallthru
        _
      %p492 = scmp.le.s32.totalorder 1, %s30
      %p493 = scmp.lt.s32.totalorder %s30, 3
      %p494 = pnand %p492, %p493
      %p495 = pneg %p494
      // Predicated region
      $region69: #{tpu_custom_call.1} parent=5 // pred_check
        _
      $region70: #{tpu_custom_call.1} parent=5 // pred_check_branch
        %497 = sbr.rel (%p494) target = $region72
      $region71: #{tpu_custom_call.1} parent=5 // pred_region
        %s498 = ssub.s32 %s30, 1
        %s499 = sand.u32 %s57, 1
        %s500 = scalar_lea.sflag [#allocation5], %s499
        %s501 = sand.u32 %s57, 1
        %s502 = smul.addr %s501, 8
        %s503 = scalar_lea.vmem [#allocation4], %s502
        // Predicated region
        $region73: #{tpu_custom_call.1} parent=71 // pred_check
          %p504 = pneg %p70
        $region74: #{tpu_custom_call.1} parent=71 // pred_check_branch
          %506 = sbr.rel (%p504) target = $region76
        $region75: #{tpu_custom_call.1} parent=71 // pred_region
          %507 = dma.done %s500, 128
        $region76: #{tpu_custom_call.1} parent=71 // pred_fallthru
          _
        %s508 = sand.u32 %s35, 1
        %s509 = scalar_lea.sflag [#allocation8], %s508
        %s510 = sand.u32 %s83, 1
        %s511 = smul.addr %s510, 8
        %s512 = scalar_lea.vmem [#allocation7], %s511
        // Predicated region
        $region77: #{tpu_custom_call.1} parent=71 // pred_check
          %p513 = pneg %p96
        $region78: #{tpu_custom_call.1} parent=71 // pred_check_branch
          %515 = sbr.rel (%p513) target = $region80
        $region79: #{tpu_custom_call.1} parent=71 // pred_region
          %516 = dma.done %s509, 128
        $region80: #{tpu_custom_call.1} parent=71 // pred_fallthru
          _
        // Predicated region
        $region81: #{tpu_custom_call.1} parent=71 // pred_check
          %p517 = pneg %p143
        $region82: #{tpu_custom_call.1} parent=71 // pred_check_branch
          %519 = sbr.rel (%p517) target = $region84
        $region83: #{tpu_custom_call.1} parent=71 // pred_region
          %520 = dma.done [#allocation8], 512
        $region84: #{tpu_custom_call.1} parent=71 // pred_fallthru
          _
        // Predicated region
        $region85: #{tpu_custom_call.1} parent=71 // pred_check
          %p521 = pneg %p185
        $region86: #{tpu_custom_call.1} parent=71 // pred_check_branch
          %523 = sbr.rel (%p521) target = $region88
        $region87: #{tpu_custom_call.1} parent=71 // pred_region
          %524 = dma.done [#allocation11], 512
        $region88: #{tpu_custom_call.1} parent=71 // pred_fallthru
          _
        // Predicated region
        $region89: #{tpu_custom_call.1} parent=71 // pred_check
          %p525 = pneg %p227
        $region90: #{tpu_custom_call.1} parent=71 // pred_check_branch
          %527 = sbr.rel (%p525) target = $region92
        $region91: #{tpu_custom_call.1} parent=71 // pred_region
          %528 = dma.done [#allocation11], 512
        $region92: #{tpu_custom_call.1} parent=71 // pred_fallthru
          _
        // Predicated region
        $region93: #{tpu_custom_call.1} parent=71 // pred_check
          %p529 = pneg %p269
        $region94: #{tpu_custom_call.1} parent=71 // pred_check_branch
          %531 = sbr.rel (%p529) target = $region96
        $region95: #{tpu_custom_call.1} parent=71 // pred_region
          %532 = dma.done [#allocation14], 512
        $region96: #{tpu_custom_call.1} parent=71 // pred_fallthru
          _
        %s533 = sand.u32 %s57, 1
        %s534 = scalar_lea.sflag [#allocation5], %s533
        %s535 = sand.u32 %s57, 1
        %s536 = smul.addr %s535, 8
        %s537 = scalar_lea.vmem [#allocation4], %s536
        %p538 = pneg %p70
        %p539 = pneg %p67
        %s540 = sand.u32 %s35, 1
        %s541 = scalar_lea.sflag [#allocation8], %s540
        %s542 = sand.u32 %s83, 1
        %s543 = smul.addr %s542, 8
        %s544 = scalar_lea.vmem [#allocation7], %s543
        %p545 = pneg %p96
        %p546 = pneg %p93
        %p547 = scmp.lt.s32.totalorder %s39, 1
        %s548 = scalar_select %p547, %s39, 1
        %s549 = scalar_lea.vmem %s2, %s548
        %p550 = pneg %p122
        %p551 = pneg %p119
        %p552 = pneg %p143
        %p553 = pneg %p140
        %p554 = pneg %p164
        %p555 = pneg %p161
        %p556 = pneg %p185
        %p557 = pneg %p182
        %p558 = pneg %p206
        %p559 = pneg %p203
        %p560 = pneg %p227
        %p561 = pneg %p224
        %p562 = pneg %p248
        %p563 = pneg %p245
        %p564 = pneg %p269
        %p565 = pneg %p266
        %p566 = pneg %p290
        %p567 = pneg %p287
        %p568 = pneg %p311
        %p569 = pneg %p308
        %p570 = pneg %p332
        %p571 = pneg %p329
        %p572 = pneg %p360
        %p573 = pneg %p357
        %s574 = sand.u32 %s347, 1
        %s575 = scalar_lea.sflag [#allocation6], %s574
        %s576 = sand.u32 %s347, 1
        %s577 = smul.addr %s576, 8
        %s578 = scalar_lea.vmem [#allocation15], %s577
        %p579 = scmp.lt.s32.totalorder %s39, 1
        %s580 = scalar_select %p579, %s39, 1
        %s581 = scalar_lea.vmem %s2, %s580
        %v582 = vld [vmem:[%s503] sm:$0xff]
        %p583 = scmp.eq.s32.totalorder %s40, 0
        // Predicated region
        $region97: #{tpu_custom_call.1} parent=71 // pred_check
          %p584 = pneg %p583
        $region98: #{tpu_custom_call.1} parent=71 // pred_check_branch
          %586 = sbr.rel (%p584) target = $region100
        $region99: #{tpu_custom_call.1} parent=71 // pred_region
          %v587 = vld [vmem:[%s512] sm:$0xff]
          %v588 = vld [vmem:[#allocation10] sm:$0xff]
          %v589 = vld [vmem:[#allocation10 + $0x8] sm:$0xff]
          %v590 = vld [vmem:[#allocation10 + $0x10] sm:$0xff]
          %v591 = vld [vmem:[#allocation10 + $0x18] sm:$0xff]
          %v592 = vld [vmem:[%s6] sm:$0x1]
          %v594 = vlaneseq
          %v595 = vshrl.u32 %v594, 7
          %v596 = vsub.s32 0, %v595
          %v597 = vrot.slane %v592, %v596
          %vm599 = vcmask 261120
          %v601 = vsel %vm599, %v587, 0
          %603 = vmatprep.subr.mxu0 0.0
          %604 = vmatpush1.msra.mxu0 0.0
          %605 = vmatprep.subr.mxu0 0.0
          %606 = vmatpush1.msra.mxu0 0.0
          %607 = vmatprep.subr.mxu0 0.0
          %608 = vmatpush1.msra.mxu0 0.0
          %609 = vmatprep.subr.mxu0 0.0
          %610 = vmatpush1.msra.mxu0 0.0
          %611 = vmatprep.subr.mxu0 0.0
          %612 = vmatpush1.msra.mxu0 0.0
          %613 = vmatprep.subr.mxu0 0.0
          %614 = vmatpush1.msra.mxu0 0.0
          %615 = vmatprep.subr.mxu0 0.0
          %616 = vmatpush1.msra.mxu0 0.0
          %617 = vmatprep.subr.mxu0 0.0
          %618 = vmatpush1.msra.mxu0 0.0
          %619 = vmatprep.subr.mxu0 0.0
          %620 = vmatpush1.msra.mxu0 0.0
          %621 = vmatprep.subr.mxu0 0.0
          %622 = vmatpush1.msra.mxu0 0.0
          %623 = vmatprep.subr.mxu0 0.0
          %624 = vmatpush1.msra.mxu0 0.0
          %625 = vmatprep.subr.mxu0 0.0
          %626 = vmatpush1.msra.mxu0 0.0
          %627 = vmatprep.subr.mxu0 0.0
          %628 = vmatpush1.msra.mxu0 %v591
          %629 = vmatprep.subr.mxu0 0.0
          %630 = vmatpush1.msra.mxu0 %v590
          %631 = vmatprep.subr.mxu0 0.0
          %632 = vmatpush1.msra.mxu0 %v589
          %633 = vmatprep.subr.mxu0 0.0
          %634 = vmatpush1.msra.mxu0 %v588
          %635 = vmatprep.subr.mxu0 0.0
          %636 = vmatpush2.msra.mxu0 0.0
          %637 = vmatprep.subr.mxu0 0.0
          %638 = vmatpush2.msra.mxu0 0.0
          %639 = vmatprep.subr.mxu0 0.0
          %640 = vmatpush2.msra.mxu0 0.0
          %641 = vmatprep.subr.mxu0 0.0
          %642 = vmatpush2.msra.mxu0 0.0
          %643 = vmatprep.subr.mxu0 0.0
          %644 = vmatpush2.msra.mxu0 0.0
          %645 = vmatprep.subr.mxu0 0.0
          %646 = vmatpush2.msra.mxu0 0.0
          %647 = vmatprep.subr.mxu0 0.0
          %648 = vmatpush2.msra.mxu0 0.0
          %649 = vmatprep.subr.mxu0 0.0
          %650 = vmatpush2.msra.mxu0 0.0
          %651 = vmatprep.subr.mxu0 0.0
          %652 = vmatpush2.msra.mxu0 0.0
          %653 = vmatprep.subr.mxu0 0.0
          %654 = vmatpush2.msra.mxu0 0.0
          %655 = vmatprep.subr.mxu0 0.0
          %656 = vmatpush2.msra.mxu0 0.0
          %657 = vmatprep.subr.mxu0 0.0
          %658 = vmatpush2.msra.mxu0 0.0
          %659 = vmatprep.subr.mxu0 0.0
          %660 = vmatpush2.msra.mxu0 0.0
          %661 = vmatprep.subr.mxu0 0.0
          %662 = vmatpush2.msra.mxu0 0.0
          %663 = vmatprep.subr.mxu0 0.0
          %664 = vmatpush2.msra.mxu0 0.0
          %665 = vmatprep.subr.mxu0 0.0
          %666 = vmatpush2.msra.mxu0 0.0
          %667 = vmatprep.mubr.f32.mxu0 0.0
          %668 = vmatmul.mubr.f32.gmra.mxu0 %v601
          %v669 = vpop.f32.mrf.mxu0
          %v670 = vadd.f32 %v597, %v669
          %v671 = vpop.f32.mrf.mxu0
          %672 = vdwg.mxu0
          %v673 = vld [vmem:[#allocation12] sm:$0xff]
          %v674 = vld [vmem:[#allocation12 + $0x8] sm:$0xff]
          %v675 = vld [vmem:[#allocation12 + $0x10] sm:$0xff]
          %v676 = vld [vmem:[#allocation12 + $0x18] sm:$0xff]
          %v677 = vld [vmem:[%s8] sm:$0x1]
          %v679 = vlaneseq
          %v680 = vshrl.u32 %v679, 7
          %v681 = vsub.s32 0, %v680
          %v682 = vrot.slane %v677, %v681
          %684 = vmatprep.subr.mxu0 0.0
          %685 = vmatpush1.msra.mxu0 0.0
          %686 = vmatprep.subr.mxu0 0.0
          %687 = vmatpush1.msra.mxu0 0.0
          %688 = vmatprep.subr.mxu0 0.0
          %689 = vmatpush1.msra.mxu0 0.0
          %690 = vmatprep.subr.mxu0 0.0
          %691 = vmatpush1.msra.mxu0 0.0
          %692 = vmatprep.subr.mxu0 0.0
          %693 = vmatpush1.msra.mxu0 0.0
          %694 = vmatprep.subr.mxu0 0.0
          %695 = vmatpush1.msra.mxu0 0.0
          %696 = vmatprep.subr.mxu0 0.0
          %697 = vmatpush1.msra.mxu0 0.0
          %698 = vmatprep.subr.mxu0 0.0
          %699 = vmatpush1.msra.mxu0 0.0
          %700 = vmatprep.subr.mxu0 0.0
          %701 = vmatpush1.msra.mxu0 0.0
          %702 = vmatprep.subr.mxu0 0.0
          %703 = vmatpush1.msra.mxu0 0.0
          %704 = vmatprep.subr.mxu0 0.0
          %705 = vmatpush1.msra.mxu0 0.0
          %706 = vmatprep.subr.mxu0 0.0
          %707 = vmatpush1.msra.mxu0 0.0
          %708 = vmatprep.subr.mxu0 0.0
          %709 = vmatpush1.msra.mxu0 %v676
          %710 = vmatprep.subr.mxu0 0.0
          %711 = vmatpush1.msra.mxu0 %v675
          %712 = vmatprep.subr.mxu0 0.0
          %713 = vmatpush1.msra.mxu0 %v674
          %714 = vmatprep.subr.mxu0 0.0
          %715 = vmatpush1.msra.mxu0 %v673
          %716 = vmatprep.subr.mxu0 0.0
          %717 = vmatpush2.msra.mxu0 0.0
          %718 = vmatprep.subr.mxu0 0.0
          %719 = vmatpush2.msra.mxu0 0.0
          %720 = vmatprep.subr.mxu0 0.0
          %721 = vmatpush2.msra.mxu0 0.0
          %722 = vmatprep.subr.mxu0 0.0
          %723 = vmatpush2.msra.mxu0 0.0
          %724 = vmatprep.subr.mxu0 0.0
          %725 = vmatpush2.msra.mxu0 0.0
          %726 = vmatprep.subr.mxu0 0.0
          %727 = vmatpush2.msra.mxu0 0.0
          %728 = vmatprep.subr.mxu0 0.0
          %729 = vmatpush2.msra.mxu0 0.0
          %730 = vmatprep.subr.mxu0 0.0
          %731 = vmatpush2.msra.mxu0 0.0
          %732 = vmatprep.subr.mxu0 0.0
          %733 = vmatpush2.msra.mxu0 0.0
          %734 = vmatprep.subr.mxu0 0.0
          %735 = vmatpush2.msra.mxu0 0.0
          %736 = vmatprep.subr.mxu0 0.0
          %737 = vmatpush2.msra.mxu0 0.0
          %738 = vmatprep.subr.mxu0 0.0
          %739 = vmatpush2.msra.mxu0 0.0
          %740 = vmatprep.subr.mxu0 0.0
          %741 = vmatpush2.msra.mxu0 0.0
          %742 = vmatprep.subr.mxu0 0.0
          %743 = vmatpush2.msra.mxu0 0.0
          %744 = vmatprep.subr.mxu0 0.0
          %745 = vmatpush2.msra.mxu0 0.0
          %746 = vmatprep.subr.mxu0 0.0
          %747 = vmatpush2.msra.mxu0 0.0
          %748 = vmatprep.mubr.f32.mxu0 0.0
          %749 = vmatmul.mubr.f32.gmra.mxu0 %v601
          %v750 = vpop.f32.mrf.mxu0
          %v751 = vadd.f32 %v682, %v750
          %v752 = vpop.f32.mrf.mxu0
          %753 = vdwg.mxu0
          %755 = vrot.lane.b32.xlu0 %v670, 120
          %v756 = vpop.permute.xlu0 %755
          %758 = vrot.lane.b32.xlu0 %v670, 112
          %v759 = vpop.permute.xlu0 %758
          %761 = vrot.lane.b32.xlu0 %v670, 104
          %v762 = vpop.permute.xlu0 %761
          %vm764 = vcmask 64512
          %765 = vst.msk [vmem:[#allocation2] sm:$0xff] %vm764, %v670
          %766 = vst.msk [vmem:[#allocation2 + $0x8] sm:$0xff] %vm764, %v756
          %767 = vst.msk [vmem:[#allocation2 + $0x10] sm:$0xff] %vm764, %v759
          %768 = vst.msk [vmem:[#allocation2 + $0x18] sm:$0xff] %vm764, %v762
          %770 = vrot.lane.b32.xlu0 %v751, 120
          %v771 = vpop.permute.xlu0 %770
          %773 = vrot.lane.b32.xlu0 %v751, 112
          %v774 = vpop.permute.xlu0 %773
          %776 = vrot.lane.b32.xlu0 %v751, 104
          %v777 = vpop.permute.xlu0 %776
          %779 = vst.msk [vmem:[#allocation3] sm:$0xff] %vm764, %v751
          %780 = vst.msk [vmem:[#allocation3 + $0x8] sm:$0xff] %vm764, %v771
          %781 = vst.msk [vmem:[#allocation3 + $0x10] sm:$0xff] %vm764, %v774
          %782 = vst.msk [vmem:[#allocation3 + $0x18] sm:$0xff] %vm764, %v777
        $region100: #{tpu_custom_call.1} parent=71 // pred_fallthru
          _
        %v783 = vld [vmem:[#allocation9] sm:$0xff]
        %v784 = vld [vmem:[#allocation9 + $0x8] sm:$0xff]
        %v785 = vld [vmem:[#allocation9 + $0x10] sm:$0xff]
        %v786 = vld [vmem:[#allocation9 + $0x18] sm:$0xff]
        %v787 = vld [vmem:[%s4] sm:$0x1]
        %v789 = vlaneseq
        %v790 = vshrl.u32 %v789, 7
        %v791 = vsub.s32 0, %v790
        %v792 = vrot.slane %v787, %v791
        %vm794 = vcmask 261120
        %v796 = vsel %vm794, %v582, 0
        %798 = vmatprep.subr.mxu0 0.0
        %799 = vmatpush1.msra.mxu0 0.0
        %800 = vmatprep.subr.mxu0 0.0
        %801 = vmatpush1.msra.mxu0 0.0
        %802 = vmatprep.subr.mxu0 0.0
        %803 = vmatpush1.msra.mxu0 0.0
        %804 = vmatprep.subr.mxu0 0.0
        %805 = vmatpush1.msra.mxu0 0.0
        %806 = vmatprep.subr.mxu0 0.0
        %807 = vmatpush1.msra.mxu0 0.0
        %808 = vmatprep.subr.mxu0 0.0
        %809 = vmatpush1.msra.mxu0 0.0
        %810 = vmatprep.subr.mxu0 0.0
        %811 = vmatpush1.msra.mxu0 0.0
        %812 = vmatprep.subr.mxu0 0.0
        %813 = vmatpush1.msra.mxu0 0.0
        %814 = vmatprep.subr.mxu0 0.0
        %815 = vmatpush1.msra.mxu0 0.0
        %816 = vmatprep.subr.mxu0 0.0
        %817 = vmatpush1.msra.mxu0 0.0
        %818 = vmatprep.subr.mxu0 0.0
        %819 = vmatpush1.msra.mxu0 0.0
        %820 = vmatprep.subr.mxu0 0.0
        %821 = vmatpush1.msra.mxu0 0.0
        %822 = vmatprep.subr.mxu0 0.0
        %823 = vmatpush1.msra.mxu0 %v786
        %824 = vmatprep.subr.mxu0 0.0
        %825 = vmatpush1.msra.mxu0 %v785
        %826 = vmatprep.subr.mxu0 0.0
        %827 = vmatpush1.msra.mxu0 %v784
        %828 = vmatprep.subr.mxu0 0.0
        %829 = vmatpush1.msra.mxu0 %v783
        %830 = vmatprep.subr.mxu0 0.0
        %831 = vmatpush2.msra.mxu0 0.0
        %832 = vmatprep.subr.mxu0 0.0
        %833 = vmatpush2.msra.mxu0 0.0
        %834 = vmatprep.subr.mxu0 0.0
        %835 = vmatpush2.msra.mxu0 0.0
        %836 = vmatprep.subr.mxu0 0.0
        %837 = vmatpush2.msra.mxu0 0.0
        %838 = vmatprep.subr.mxu0 0.0
        %839 = vmatpush2.msra.mxu0 0.0
        %840 = vmatprep.subr.mxu0 0.0
        %841 = vmatpush2.msra.mxu0 0.0
        %842 = vmatprep.subr.mxu0 0.0
        %843 = vmatpush2.msra.mxu0 0.0
        %844 = vmatprep.subr.mxu0 0.0
        %845 = vmatpush2.msra.mxu0 0.0
        %846 = vmatprep.subr.mxu0 0.0
        %847 = vmatpush2.msra.mxu0 0.0
        %848 = vmatprep.subr.mxu0 0.0
        %849 = vmatpush2.msra.mxu0 0.0
        %850 = vmatprep.subr.mxu0 0.0
        %851 = vmatpush2.msra.mxu0 0.0
        %852 = vmatprep.subr.mxu0 0.0
        %853 = vmatpush2.msra.mxu0 0.0
        %854 = vmatprep.subr.mxu0 0.0
        %855 = vmatpush2.msra.mxu0 0.0
        %856 = vmatprep.subr.mxu0 0.0
        %857 = vmatpush2.msra.mxu0 0.0
        %858 = vmatprep.subr.mxu0 0.0
        %859 = vmatpush2.msra.mxu0 0.0
        %860 = vmatprep.subr.mxu0 0.0
        %861 = vmatpush2.msra.mxu0 0.0
        %862 = vmatprep.mubr.f32.mxu0 0.0
        %863 = vmatmul.mubr.f32.gmra.mxu0 %v796
        %v864 = vpop.f32.mrf.mxu0
        %v865 = vadd.f32 %v792, %v864
        %v866 = vpop.f32.mrf.mxu0
        %867 = vdwg.mxu0
        %v868 = vmul.f32 %v865, 0.35355338
        %870 = vrot.lane.b32.xlu0 %v868, 120
        %v871 = vpop.permute.xlu0 %870
        %872 = vrot.lane.b32.xlu0 %v868, 112
        %v873 = vpop.permute.xlu0 %872
        %874 = vrot.lane.b32.xlu0 %v868, 104
        %v875 = vpop.permute.xlu0 %874
        %v876 = vld [vmem:[#allocation2] sm:$0xff]
        %v877 = vld [vmem:[#allocation2 + $0x8] sm:$0xff]
        %v878 = vld [vmem:[#allocation2 + $0x10] sm:$0xff]
        %v879 = vld [vmem:[#allocation2 + $0x18] sm:$0xff]
        %v880 = vld [vmem:[%s581] sm:$0x1]
        %v882 = vlaneseq
        %v883 = vshrl.u32 %v882, 7
        %v884 = vsub.s32 0, %v883
        %v885 = vrot.slane %v880, %v884
        %vm887 = vcmask 64512
        %v888 = vsel %vm887, %v868, 0
        %v891 = vsel %vm887, %v876, 0
        %893 = vmatprep.subr.mxu0 0.0
        %894 = vmatpush1.xpose.msra.mxu0 0.0
        %895 = vmatprep.subr.mxu0 0.0
        %896 = vmatpush1.xpose.msra.mxu0 0.0
        %897 = vmatprep.subr.mxu0 0.0
        %898 = vmatpush1.xpose.msra.mxu0 0.0
        %899 = vmatprep.subr.mxu0 0.0
        %900 = vmatpush1.xpose.msra.mxu0 0.0
        %901 = vmatprep.subr.mxu0 0.0
        %902 = vmatpush1.xpose.msra.mxu0 0.0
        %903 = vmatprep.subr.mxu0 0.0
        %904 = vmatpush1.xpose.msra.mxu0 0.0
        %905 = vmatprep.subr.mxu0 0.0
        %906 = vmatpush1.xpose.msra.mxu0 0.0
        %907 = vmatprep.subr.mxu0 0.0
        %908 = vmatpush1.xpose.msra.mxu0 0.0
        %909 = vmatprep.subr.mxu0 0.0
        %910 = vmatpush1.xpose.msra.mxu0 0.0
        %911 = vmatprep.subr.mxu0 0.0
        %912 = vmatpush1.xpose.msra.mxu0 0.0
        %913 = vmatprep.subr.mxu0 0.0
        %914 = vmatpush1.xpose.msra.mxu0 0.0
        %915 = vmatprep.subr.mxu0 0.0
        %916 = vmatpush1.xpose.msra.mxu0 0.0
        %917 = vmatprep.subr.mxu0 0.0
        %918 = vmatpush1.xpose.msra.mxu0 0.0
        %919 = vmatprep.subr.mxu0 0.0
        %920 = vmatpush1.xpose.msra.mxu0 0.0
        %921 = vmatprep.subr.mxu0 0.0
        %922 = vmatpush1.xpose.msra.mxu0 0.0
        %923 = vmatprep.subr.mxu0 0.0
        %924 = vmatpush1.xpose.msra.mxu0 %v891
        %925 = vmatprep.subr.mxu0 0.0
        %926 = vmatpush2.xpose.msra.mxu0 0.0
        %927 = vmatprep.subr.mxu0 0.0
        %928 = vmatpush2.xpose.msra.mxu0 0.0
        %929 = vmatprep.subr.mxu0 0.0
        %930 = vmatpush2.xpose.msra.mxu0 0.0
        %931 = vmatprep.subr.mxu0 0.0
        %932 = vmatpush2.xpose.msra.mxu0 0.0
        %933 = vmatprep.subr.mxu0 0.0
        %934 = vmatpush2.xpose.msra.mxu0 0.0
        %935 = vmatprep.subr.mxu0 0.0
        %936 = vmatpush2.xpose.msra.mxu0 0.0
        %937 = vmatprep.subr.mxu0 0.0
        %938 = vmatpush2.xpose.msra.mxu0 0.0
        %939 = vmatprep.subr.mxu0 0.0
        %940 = vmatpush2.xpose.msra.mxu0 0.0
        %941 = vmatprep.subr.mxu0 0.0
        %942 = vmatpush2.xpose.msra.mxu0 0.0
        %943 = vmatprep.subr.mxu0 0.0
        %944 = vmatpush2.xpose.msra.mxu0 0.0
        %945 = vmatprep.subr.mxu0 0.0
        %946 = vmatpush2.xpose.msra.mxu0 0.0
        %947 = vmatprep.subr.mxu0 0.0
        %948 = vmatpush2.xpose.msra.mxu0 0.0
        %949 = vmatprep.subr.mxu0 0.0
        %950 = vmatpush2.xpose.msra.mxu0 0.0
        %951 = vmatprep.subr.mxu0 0.0
        %952 = vmatpush2.xpose.msra.mxu0 0.0
        %953 = vmatprep.subr.mxu0 0.0
        %954 = vmatpush2.xpose.msra.mxu0 0.0
        %955 = vmatprep.subr.mxu0 0.0
        %956 = vmatpush2.xpose.msra.mxu0 0.0
        %957 = vmatprep.mubr.f32.mxu0 0.0
        %958 = vmatmul.mubr.f32.gmra.mxu0 %v888
        %v959 = vpop.f32.mrf.mxu0
        %v960 = vadd.f32 %v885, %v959
        %v961 = vpop.f32.mrf.mxu0
        %962 = vdwg.mxu0
        %v963 = vsel %vm887, %v871, 0
        %v966 = vsel %vm887, %v877, 0
        %968 = vmatprep.subr.mxu0 0.0
        %969 = vmatpush1.xpose.msra.mxu0 0.0
        %970 = vmatprep.subr.mxu0 0.0
        %971 = vmatpush1.xpose.msra.mxu0 0.0
        %972 = vmatprep.subr.mxu0 0.0
        %973 = vmatpush1.xpose.msra.mxu0 0.0
        %974 = vmatprep.subr.mxu0 0.0
        %975 = vmatpush1.xpose.msra.mxu0 0.0
        %976 = vmatprep.subr.mxu0 0.0
        %977 = vmatpush1.xpose.msra.mxu0 0.0
        %978 = vmatprep.subr.mxu0 0.0
        %979 = vmatpush1.xpose.msra.mxu0 0.0
        %980 = vmatprep.subr.mxu0 0.0
        %981 = vmatpush1.xpose.msra.mxu0 0.0
        %982 = vmatprep.subr.mxu0 0.0
        %983 = vmatpush1.xpose.msra.mxu0 0.0
        %984 = vmatprep.subr.mxu0 0.0
        %985 = vmatpush1.xpose.msra.mxu0 0.0
        %986 = vmatprep.subr.mxu0 0.0
        %987 = vmatpush1.xpose.msra.mxu0 0.0
        %988 = vmatprep.subr.mxu0 0.0
        %989 = vmatpush1.xpose.msra.mxu0 0.0
        %990 = vmatprep.subr.mxu0 0.0
        %991 = vmatpush1.xpose.msra.mxu0 0.0
        %992 = vmatprep.subr.mxu0 0.0
        %993 = vmatpush1.xpose.msra.mxu0 0.0
        %994 = vmatprep.subr.mxu0 0.0
        %995 = vmatpush1.xpose.msra.mxu0 0.0
        %996 = vmatprep.subr.mxu0 0.0
        %997 = vmatpush1.xpose.msra.mxu0 0.0
        %998 = vmatprep.subr.mxu0 0.0
        %999 = vmatpush1.xpose.msra.mxu0 %v966
        %1000 = vmatprep.subr.mxu0 0.0
        %1001 = vmatpush2.xpose.msra.mxu0 0.0
        %1002 = vmatprep.subr.mxu0 0.0
        %1003 = vmatpush2.xpose.msra.mxu0 0.0
        %1004 = vmatprep.subr.mxu0 0.0
        %1005 = vmatpush2.xpose.msra.mxu0 0.0
        %1006 = vmatprep.subr.mxu0 0.0
        %1007 = vmatpush2.xpose.msra.mxu0 0.0
        %1008 = vmatprep.subr.mxu0 0.0
        %1009 = vmatpush2.xpose.msra.mxu0 0.0
        %1010 = vmatprep.subr.mxu0 0.0
        %1011 = vmatpush2.xpose.msra.mxu0 0.0
        %1012 = vmatprep.subr.mxu0 0.0
        %1013 = vmatpush2.xpose.msra.mxu0 0.0
        %1014 = vmatprep.subr.mxu0 0.0
        %1015 = vmatpush2.xpose.msra.mxu0 0.0
        %1016 = vmatprep.subr.mxu0 0.0
        %1017 = vmatpush2.xpose.msra.mxu0 0.0
        %1018 = vmatprep.subr.mxu0 0.0
        %1019 = vmatpush2.xpose.msra.mxu0 0.0
        %1020 = vmatprep.subr.mxu0 0.0
        %1021 = vmatpush2.xpose.msra.mxu0 0.0
        %1022 = vmatprep.subr.mxu0 0.0
        %1023 = vmatpush2.xpose.msra.mxu0 0.0
        %1024 = vmatprep.subr.mxu0 0.0
        %1025 = vmatpush2.xpose.msra.mxu0 0.0
        %1026 = vmatprep.subr.mxu0 0.0
        %1027 = vmatpush2.xpose.msra.mxu0 0.0
        %1028 = vmatprep.subr.mxu0 0.0
        %1029 = vmatpush2.xpose.msra.mxu0 0.0
        %1030 = vmatprep.subr.mxu0 0.0
        %1031 = vmatpush2.xpose.msra.mxu0 0.0
        %1032 = vmatprep.mubr.f32.mxu0 0.0
        %1033 = vmatmul.mubr.f32.gmra.mxu0 %v963
        %v1034 = vpop.f32.mrf.mxu0
        %v1035 = vadd.f32 %v885, %v1034
        %v1036 = vpop.f32.mrf.mxu0
        %1037 = vdwg.mxu0
        %v1038 = vsel %vm887, %v873, 0
        %v1041 = vsel %vm887, %v878, 0
        %1043 = vmatprep.subr.mxu0 0.0
        %1044 = vmatpush1.xpose.msra.mxu0 0.0
        %1045 = vmatprep.subr.mxu0 0.0
        %1046 = vmatpush1.xpose.msra.mxu0 0.0
        %1047 = vmatprep.subr.mxu0 0.0
        %1048 = vmatpush1.xpose.msra.mxu0 0.0
        %1049 = vmatprep.subr.mxu0 0.0
        %1050 = vmatpush1.xpose.msra.mxu0 0.0
        %1051 = vmatprep.subr.mxu0 0.0
        %1052 = vmatpush1.xpose.msra.mxu0 0.0
        %1053 = vmatprep.subr.mxu0 0.0
        %1054 = vmatpush1.xpose.msra.mxu0 0.0
        %1055 = vmatprep.subr.mxu0 0.0
        %1056 = vmatpush1.xpose.msra.mxu0 0.0
        %1057 = vmatprep.subr.mxu0 0.0
        %1058 = vmatpush1.xpose.msra.mxu0 0.0
        %1059 = vmatprep.subr.mxu0 0.0
        %1060 = vmatpush1.xpose.msra.mxu0 0.0
        %1061 = vmatprep.subr.mxu0 0.0
        %1062 = vmatpush1.xpose.msra.mxu0 0.0
        %1063 = vmatprep.subr.mxu0 0.0
        %1064 = vmatpush1.xpose.msra.mxu0 0.0
        %1065 = vmatprep.subr.mxu0 0.0
        %1066 = vmatpush1.xpose.msra.mxu0 0.0
        %1067 = vmatprep.subr.mxu0 0.0
        %1068 = vmatpush1.xpose.msra.mxu0 0.0
        %1069 = vmatprep.subr.mxu0 0.0
        %1070 = vmatpush1.xpose.msra.mxu0 0.0
        %1071 = vmatprep.subr.mxu0 0.0
        %1072 = vmatpush1.xpose.msra.mxu0 0.0
        %1073 = vmatprep.subr.mxu0 0.0
        %1074 = vmatpush1.xpose.msra.mxu0 %v1041
        %1075 = vmatprep.subr.mxu0 0.0
        %1076 = vmatpush2.xpose.msra.mxu0 0.0
        %1077 = vmatprep.subr.mxu0 0.0
        %1078 = vmatpush2.xpose.msra.mxu0 0.0
        %1079 = vmatprep.subr.mxu0 0.0
        %1080 = vmatpush2.xpose.msra.mxu0 0.0
        %1081 = vmatprep.subr.mxu0 0.0
        %1082 = vmatpush2.xpose.msra.mxu0 0.0
        %1083 = vmatprep.subr.mxu0 0.0
        %1084 = vmatpush2.xpose.msra.mxu0 0.0
        %1085 = vmatprep.subr.mxu0 0.0
        %1086 = vmatpush2.xpose.msra.mxu0 0.0
        %1087 = vmatprep.subr.mxu0 0.0
        %1088 = vmatpush2.xpose.msra.mxu0 0.0
        %1089 = vmatprep.subr.mxu0 0.0
        %1090 = vmatpush2.xpose.msra.mxu0 0.0
        %1091 = vmatprep.subr.mxu0 0.0
        %1092 = vmatpush2.xpose.msra.mxu0 0.0
        %1093 = vmatprep.subr.mxu0 0.0
        %1094 = vmatpush2.xpose.msra.mxu0 0.0
        %1095 = vmatprep.subr.mxu0 0.0
        %1096 = vmatpush2.xpose.msra.mxu0 0.0
        %1097 = vmatprep.subr.mxu0 0.0
        %1098 = vmatpush2.xpose.msra.mxu0 0.0
        %1099 = vmatprep.subr.mxu0 0.0
        %1100 = vmatpush2.xpose.msra.mxu0 0.0
        %1101 = vmatprep.subr.mxu0 0.0
        %1102 = vmatpush2.xpose.msra.mxu0 0.0
        %1103 = vmatprep.subr.mxu0 0.0
        %1104 = vmatpush2.xpose.msra.mxu0 0.0
        %1105 = vmatprep.subr.mxu0 0.0
        %1106 = vmatpush2.xpose.msra.mxu0 0.0
        %1107 = vmatprep.mubr.f32.mxu0 0.0
        %1108 = vmatmul.mubr.f32.gmra.mxu0 %v1038
        %v1109 = vpop.f32.mrf.mxu0
        %v1110 = vadd.f32 %v885, %v1109
        %v1111 = vpop.f32.mrf.mxu0
        %1112 = vdwg.mxu0
        %v1113 = vsel %vm887, %v875, 0
        %v1116 = vsel %vm887, %v879, 0
        %1118 = vmatprep.subr.mxu0 0.0
        %1119 = vmatpush1.xpose.msra.mxu0 0.0
        %1120 = vmatprep.subr.mxu0 0.0
        %1121 = vmatpush1.xpose.msra.mxu0 0.0
        %1122 = vmatprep.subr.mxu0 0.0
        %1123 = vmatpush1.xpose.msra.mxu0 0.0
        %1124 = vmatprep.subr.mxu0 0.0
        %1125 = vmatpush1.xpose.msra.mxu0 0.0
        %1126 = vmatprep.subr.mxu0 0.0
        %1127 = vmatpush1.xpose.msra.mxu0 0.0
        %1128 = vmatprep.subr.mxu0 0.0
        %1129 = vmatpush1.xpose.msra.mxu0 0.0
        %1130 = vmatprep.subr.mxu0 0.0
        %1131 = vmatpush1.xpose.msra.mxu0 0.0
        %1132 = vmatprep.subr.mxu0 0.0
        %1133 = vmatpush1.xpose.msra.mxu0 0.0
        %1134 = vmatprep.subr.mxu0 0.0
        %1135 = vmatpush1.xpose.msra.mxu0 0.0
        %1136 = vmatprep.subr.mxu0 0.0
        %1137 = vmatpush1.xpose.msra.mxu0 0.0
        %1138 = vmatprep.subr.mxu0 0.0
        %1139 = vmatpush1.xpose.msra.mxu0 0.0
        %1140 = vmatprep.subr.mxu0 0.0
        %1141 = vmatpush1.xpose.msra.mxu0 0.0
        %1142 = vmatprep.subr.mxu0 0.0
        %1143 = vmatpush1.xpose.msra.mxu0 0.0
        %1144 = vmatprep.subr.mxu0 0.0
        %1145 = vmatpush1.xpose.msra.mxu0 0.0
        %1146 = vmatprep.subr.mxu0 0.0
        %1147 = vmatpush1.xpose.msra.mxu0 0.0
        %1148 = vmatprep.subr.mxu0 0.0
        %1149 = vmatpush1.xpose.msra.mxu0 %v1116
        %1150 = vmatprep.subr.mxu0 0.0
        %1151 = vmatpush2.xpose.msra.mxu0 0.0
        %1152 = vmatprep.subr.mxu0 0.0
        %1153 = vmatpush2.xpose.msra.mxu0 0.0
        %1154 = vmatprep.subr.mxu0 0.0
        %1155 = vmatpush2.xpose.msra.mxu0 0.0
        %1156 = vmatprep.subr.mxu0 0.0
        %1157 = vmatpush2.xpose.msra.mxu0 0.0
        %1158 = vmatprep.subr.mxu0 0.0
        %1159 = vmatpush2.xpose.msra.mxu0 0.0
        %1160 = vmatprep.subr.mxu0 0.0
        %1161 = vmatpush2.xpose.msra.mxu0 0.0
        %1162 = vmatprep.subr.mxu0 0.0
        %1163 = vmatpush2.xpose.msra.mxu0 0.0
        %1164 = vmatprep.subr.mxu0 0.0
        %1165 = vmatpush2.xpose.msra.mxu0 0.0
        %1166 = vmatprep.subr.mxu0 0.0
        %1167 = vmatpush2.xpose.msra.mxu0 0.0
        %1168 = vmatprep.subr.mxu0 0.0
        %1169 = vmatpush2.xpose.msra.mxu0 0.0
        %1170 = vmatprep.subr.mxu0 0.0
        %1171 = vmatpush2.xpose.msra.mxu0 0.0
        %1172 = vmatprep.subr.mxu0 0.0
        %1173 = vmatpush2.xpose.msra.mxu0 0.0
        %1174 = vmatprep.subr.mxu0 0.0
        %1175 = vmatpush2.xpose.msra.mxu0 0.0
        %1176 = vmatprep.subr.mxu0 0.0
        %1177 = vmatpush2.xpose.msra.mxu0 0.0
        %1178 = vmatprep.subr.mxu0 0.0
        %1179 = vmatpush2.xpose.msra.mxu0 0.0
        %1180 = vmatprep.subr.mxu0 0.0
        %1181 = vmatpush2.xpose.msra.mxu0 0.0
        %1182 = vmatprep.mubr.f32.mxu0 0.0
        %1183 = vmatmul.mubr.f32.gmra.mxu0 %v1113
        %v1184 = vpop.f32.mrf.mxu0
        %v1185 = vadd.f32 %v885, %v1184
        %v1186 = vpop.f32.mrf.mxu0
        %1187 = vdwg.mxu0
        %v1188 = vsel %vm887, %v960, -inf
        %1189 = vmax.xlane.f32.xlu0 %v1188
        %v1190 = vpop.xlane.xlu0 %1189
        %v1191 = vsel %vm887, %v1035, -inf
        %1192 = vmax.xlane.f32.xlu0 %v1191
        %v1193 = vpop.xlane.xlu0 %1192
        %v1194 = vsel %vm887, %v1110, -inf
        %1195 = vmax.xlane.f32.xlu0 %v1194
        %v1196 = vpop.xlane.xlu0 %1195
        %v1197 = vsel %vm887, %v1185, -inf
        %1198 = vmax.xlane.f32.xlu0 %v1197
        %v1199 = vpop.xlane.xlu0 %1198
        %v1200 = vsub.f32 %v960, %v1190
        %v1201 = vsub.f32 %v1035, %v1193
        %v1202 = vsub.f32 %v1110, %v1196
        %v1203 = vsub.f32 %v1185, %v1199
        %v1204 = vmul.f32 %v1200, 1.442695
        %v1205 = vpow.pop %v1204
        %v1206 = vmul.f32 %v1201, 1.442695
        %v1207 = vpow.pop %v1206
        %v1208 = vmul.f32 %v1202, 1.442695
        %v1209 = vpow.pop %v1208
        %v1210 = vmul.f32 %v1203, 1.442695
        %v1211 = vpow.pop %v1210
        %v1212 = vsel %vm887, %v1205, 0.0
        %1213 = vadd.xlane.f32.xlu0 %v1212
        %v1214 = vpop.xlane.xlu0 %1213
        %v1215 = vsel %vm887, %v1207, 0.0
        %1216 = vadd.xlane.f32.xlu0 %v1215
        %v1217 = vpop.xlane.xlu0 %1216
        %v1218 = vsel %vm887, %v1209, 0.0
        %1219 = vadd.xlane.f32.xlu0 %v1218
        %v1220 = vpop.xlane.xlu0 %1219
        %v1221 = vsel %vm887, %v1211, 0.0
        %1222 = vadd.xlane.f32.xlu0 %v1221
        %v1223 = vpop.xlane.xlu0 %1222
        %v1224 = vrcp.pop %v1214
        %v1225 = vrcp.pop %v1217
        %v1226 = vrcp.pop %v1220
        %v1227 = vrcp.pop %v1223
        %v1228 = vmul.f32 %v1205, %v1224
        %v1229 = vmul.f32 %v1207, %v1225
        %v1230 = vmul.f32 %v1209, %v1226
        %v1231 = vmul.f32 %v1211, %v1227
        %v1232 = vld [vmem:[#allocation3] sm:$0xff]
        %v1233 = vld [vmem:[#allocation3 + $0x8] sm:$0xff]
        %v1234 = vld [vmem:[#allocation3 + $0x10] sm:$0xff]
        %v1235 = vld [vmem:[#allocation3 + $0x18] sm:$0xff]
        %v1237 = vsel %vm887, %v1228, 0
        %1239 = vmatprep.subr.mxu0 0.0
        %1240 = vmatpush1.msra.mxu0 0.0
        %1241 = vmatprep.subr.mxu0 0.0
        %1242 = vmatpush1.msra.mxu0 0.0
        %1243 = vmatprep.subr.mxu0 0.0
        %1244 = vmatpush1.msra.mxu0 0.0
        %1245 = vmatprep.subr.mxu0 0.0
        %1246 = vmatpush1.msra.mxu0 0.0
        %1247 = vmatprep.subr.mxu0 0.0
        %1248 = vmatpush1.msra.mxu0 0.0
        %1249 = vmatprep.subr.mxu0 0.0
        %1250 = vmatpush1.msra.mxu0 0.0
        %1251 = vmatprep.subr.mxu0 0.0
        %1252 = vmatpush1.msra.mxu0 0.0
        %1253 = vmatprep.subr.mxu0 0.0
        %1254 = vmatpush1.msra.mxu0 0.0
        %1255 = vmatprep.subr.mxu0 0.0
        %1256 = vmatpush1.msra.mxu0 0.0
        %1257 = vmatprep.subr.mxu0 0.0
        %1258 = vmatpush1.msra.mxu0 0.0
        %1259 = vmatprep.subr.mxu0 0.0
        %1260 = vmatpush1.msra.mxu0 0.0
        %1261 = vmatprep.subr.mxu0 0.0
        %1262 = vmatpush1.msra.mxu0 0.0
        %1263 = vmatprep.subr.mxu0 0.0
        %1264 = vmatpush1.msra.mxu0 0.0
        %1265 = vmatprep.subr.mxu0 0.0
        %1266 = vmatpush1.msra.mxu0 0.0
        %1267 = vmatprep.subr.mxu0 0.0
        %1268 = vmatpush1.msra.mxu0 0.0
        %1269 = vmatprep.subr.mxu0 0.0
        %1270 = vmatpush1.msra.mxu0 %v1232
        %1271 = vmatprep.subr.mxu0 0.0
        %1272 = vmatpush2.msra.mxu0 0.0
        %1273 = vmatprep.subr.mxu0 0.0
        %1274 = vmatpush2.msra.mxu0 0.0
        %1275 = vmatprep.subr.mxu0 0.0
        %1276 = vmatpush2.msra.mxu0 0.0
        %1277 = vmatprep.subr.mxu0 0.0
        %1278 = vmatpush2.msra.mxu0 0.0
        %1279 = vmatprep.subr.mxu0 0.0
        %1280 = vmatpush2.msra.mxu0 0.0
        %1281 = vmatprep.subr.mxu0 0.0
        %1282 = vmatpush2.msra.mxu0 0.0
        %1283 = vmatprep.subr.mxu0 0.0
        %1284 = vmatpush2.msra.mxu0 0.0
        %1285 = vmatprep.subr.mxu0 0.0
        %1286 = vmatpush2.msra.mxu0 0.0
        %1287 = vmatprep.subr.mxu0 0.0
        %1288 = vmatpush2.msra.mxu0 0.0
        %1289 = vmatprep.subr.mxu0 0.0
        %1290 = vmatpush2.msra.mxu0 0.0
        %1291 = vmatprep.subr.mxu0 0.0
        %1292 = vmatpush2.msra.mxu0 0.0
        %1293 = vmatprep.subr.mxu0 0.0
        %1294 = vmatpush2.msra.mxu0 0.0
        %1295 = vmatprep.subr.mxu0 0.0
        %1296 = vmatpush2.msra.mxu0 0.0
        %1297 = vmatprep.subr.mxu0 0.0
        %1298 = vmatpush2.msra.mxu0 0.0
        %1299 = vmatprep.subr.mxu0 0.0
        %1300 = vmatpush2.msra.mxu0 0.0
        %1301 = vmatprep.subr.mxu0 0.0
        %1302 = vmatpush2.msra.mxu0 0.0
        %1303 = vmatprep.mubr.f32.mxu0 0.0
        %1304 = vmatmul.mubr.f32.gmra.mxu0 %v1237
        %v1305 = vpop.f32.mrf.mxu0
        %v1306 = vadd.f32 0.0, %v1305
        %v1307 = vpop.f32.mrf.mxu0
        %1308 = vdwg.mxu0
        %v1310 = vsel %vm887, %v1229, 0
        %1312 = vmatprep.subr.mxu0 0.0
        %1313 = vmatpush1.msra.mxu0 0.0
        %1314 = vmatprep.subr.mxu0 0.0
        %1315 = vmatpush1.msra.mxu0 0.0
        %1316 = vmatprep.subr.mxu0 0.0
        %1317 = vmatpush1.msra.mxu0 0.0
        %1318 = vmatprep.subr.mxu0 0.0
        %1319 = vmatpush1.msra.mxu0 0.0
        %1320 = vmatprep.subr.mxu0 0.0
        %1321 = vmatpush1.msra.mxu0 0.0
        %1322 = vmatprep.subr.mxu0 0.0
        %1323 = vmatpush1.msra.mxu0 0.0
        %1324 = vmatprep.subr.mxu0 0.0
        %1325 = vmatpush1.msra.mxu0 0.0
        %1326 = vmatprep.subr.mxu0 0.0
        %1327 = vmatpush1.msra.mxu0 0.0
        %1328 = vmatprep.subr.mxu0 0.0
        %1329 = vmatpush1.msra.mxu0 0.0
        %1330 = vmatprep.subr.mxu0 0.0
        %1331 = vmatpush1.msra.mxu0 0.0
        %1332 = vmatprep.subr.mxu0 0.0
        %1333 = vmatpush1.msra.mxu0 0.0
        %1334 = vmatprep.subr.mxu0 0.0
        %1335 = vmatpush1.msra.mxu0 0.0
        %1336 = vmatprep.subr.mxu0 0.0
        %1337 = vmatpush1.msra.mxu0 0.0
        %1338 = vmatprep.subr.mxu0 0.0
        %1339 = vmatpush1.msra.mxu0 0.0
        %1340 = vmatprep.subr.mxu0 0.0
        %1341 = vmatpush1.msra.mxu0 0.0
        %1342 = vmatprep.subr.mxu0 0.0
        %1343 = vmatpush1.msra.mxu0 %v1233
        %1344 = vmatprep.subr.mxu0 0.0
        %1345 = vmatpush2.msra.mxu0 0.0
        %1346 = vmatprep.subr.mxu0 0.0
        %1347 = vmatpush2.msra.mxu0 0.0
        %1348 = vmatprep.subr.mxu0 0.0
        %1349 = vmatpush2.msra.mxu0 0.0
        %1350 = vmatprep.subr.mxu0 0.0
        %1351 = vmatpush2.msra.mxu0 0.0
        %1352 = vmatprep.subr.mxu0 0.0
        %1353 = vmatpush2.msra.mxu0 0.0
        %1354 = vmatprep.subr.mxu0 0.0
        %1355 = vmatpush2.msra.mxu0 0.0
        %1356 = vmatprep.subr.mxu0 0.0
        %1357 = vmatpush2.msra.mxu0 0.0
        %1358 = vmatprep.subr.mxu0 0.0
        %1359 = vmatpush2.msra.mxu0 0.0
        %1360 = vmatprep.subr.mxu0 0.0
        %1361 = vmatpush2.msra.mxu0 0.0
        %1362 = vmatprep.subr.mxu0 0.0
        %1363 = vmatpush2.msra.mxu0 0.0
        %1364 = vmatprep.subr.mxu0 0.0
        %1365 = vmatpush2.msra.mxu0 0.0
        %1366 = vmatprep.subr.mxu0 0.0
        %1367 = vmatpush2.msra.mxu0 0.0
        %1368 = vmatprep.subr.mxu0 0.0
        %1369 = vmatpush2.msra.mxu0 0.0
        %1370 = vmatprep.subr.mxu0 0.0
        %1371 = vmatpush2.msra.mxu0 0.0
        %1372 = vmatprep.subr.mxu0 0.0
        %1373 = vmatpush2.msra.mxu0 0.0
        %1374 = vmatprep.subr.mxu0 0.0
        %1375 = vmatpush2.msra.mxu0 0.0
        %1376 = vmatprep.mubr.f32.mxu0 0.0
        %1377 = vmatmul.mubr.f32.gmra.mxu0 %v1310
        %v1378 = vpop.f32.mrf.mxu0
        %v1379 = vadd.f32 0.0, %v1378
        %v1380 = vpop.f32.mrf.mxu0
        %1381 = vdwg.mxu0
        %v1383 = vsel %vm887, %v1230, 0
        %1385 = vmatprep.subr.mxu0 0.0
        %1386 = vmatpush1.msra.mxu0 0.0
        %1387 = vmatprep.subr.mxu0 0.0
        %1388 = vmatpush1.msra.mxu0 0.0
        %1389 = vmatprep.subr.mxu0 0.0
        %1390 = vmatpush1.msra.mxu0 0.0
        %1391 = vmatprep.subr.mxu0 0.0
        %1392 = vmatpush1.msra.mxu0 0.0
        %1393 = vmatprep.subr.mxu0 0.0
        %1394 = vmatpush1.msra.mxu0 0.0
        %1395 = vmatprep.subr.mxu0 0.0
        %1396 = vmatpush1.msra.mxu0 0.0
        %1397 = vmatprep.subr.mxu0 0.0
        %1398 = vmatpush1.msra.mxu0 0.0
        %1399 = vmatprep.subr.mxu0 0.0
        %1400 = vmatpush1.msra.mxu0 0.0
        %1401 = vmatprep.subr.mxu0 0.0
        %1402 = vmatpush1.msra.mxu0 0.0
        %1403 = vmatprep.subr.mxu0 0.0
        %1404 = vmatpush1.msra.mxu0 0.0
        %1405 = vmatprep.subr.mxu0 0.0
        %1406 = vmatpush1.msra.mxu0 0.0
        %1407 = vmatprep.subr.mxu0 0.0
        %1408 = vmatpush1.msra.mxu0 0.0
        %1409 = vmatprep.subr.mxu0 0.0
        %1410 = vmatpush1.msra.mxu0 0.0
        %1411 = vmatprep.subr.mxu0 0.0
        %1412 = vmatpush1.msra.mxu0 0.0
        %1413 = vmatprep.subr.mxu0 0.0
        %1414 = vmatpush1.msra.mxu0 0.0
        %1415 = vmatprep.subr.mxu0 0.0
        %1416 = vmatpush1.msra.mxu0 %v1234
        %1417 = vmatprep.subr.mxu0 0.0
        %1418 = vmatpush2.msra.mxu0 0.0
        %1419 = vmatprep.subr.mxu0 0.0
        %1420 = vmatpush2.msra.mxu0 0.0
        %1421 = vmatprep.subr.mxu0 0.0
        %1422 = vmatpush2.msra.mxu0 0.0
        %1423 = vmatprep.subr.mxu0 0.0
        %1424 = vmatpush2.msra.mxu0 0.0
        %1425 = vmatprep.subr.mxu0 0.0
        %1426 = vmatpush2.msra.mxu0 0.0
        %1427 = vmatprep.subr.mxu0 0.0
        %1428 = vmatpush2.msra.mxu0 0.0
        %1429 = vmatprep.subr.mxu0 0.0
        %1430 = vmatpush2.msra.mxu0 0.0
        %1431 = vmatprep.subr.mxu0 0.0
        %1432 = vmatpush2.msra.mxu0 0.0
        %1433 = vmatprep.subr.mxu0 0.0
        %1434 = vmatpush2.msra.mxu0 0.0
        %1435 = vmatprep.subr.mxu0 0.0
        %1436 = vmatpush2.msra.mxu0 0.0
        %1437 = vmatprep.subr.mxu0 0.0
        %1438 = vmatpush2.msra.mxu0 0.0
        %1439 = vmatprep.subr.mxu0 0.0
        %1440 = vmatpush2.msra.mxu0 0.0
        %1441 = vmatprep.subr.mxu0 0.0
        %1442 = vmatpush2.msra.mxu0 0.0
        %1443 = vmatprep.subr.mxu0 0.0
        %1444 = vmatpush2.msra.mxu0 0.0
        %1445 = vmatprep.subr.mxu0 0.0
        %1446 = vmatpush2.msra.mxu0 0.0
        %1447 = vmatprep.subr.mxu0 0.0
        %1448 = vmatpush2.msra.mxu0 0.0
        %1449 = vmatprep.mubr.f32.mxu0 0.0
        %1450 = vmatmul.mubr.f32.gmra.mxu0 %v1383
        %v1451 = vpop.f32.mrf.mxu0
        %v1452 = vadd.f32 0.0, %v1451
        %v1453 = vpop.f32.mrf.mxu0
        %1454 = vdwg.mxu0
        %v1456 = vsel %vm887, %v1231, 0
        %1458 = vmatprep.subr.mxu0 0.0
        %1459 = vmatpush1.msra.mxu0 0.0
        %1460 = vmatprep.subr.mxu0 0.0
        %1461 = vmatpush1.msra.mxu0 0.0
        %1462 = vmatprep.subr.mxu0 0.0
        %1463 = vmatpush1.msra.mxu0 0.0
        %1464 = vmatprep.subr.mxu0 0.0
        %1465 = vmatpush1.msra.mxu0 0.0
        %1466 = vmatprep.subr.mxu0 0.0
        %1467 = vmatpush1.msra.mxu0 0.0
        %1468 = vmatprep.subr.mxu0 0.0
        %1469 = vmatpush1.msra.mxu0 0.0
        %1470 = vmatprep.subr.mxu0 0.0
        %1471 = vmatpush1.msra.mxu0 0.0
        %1472 = vmatprep.subr.mxu0 0.0
        %1473 = vmatpush1.msra.mxu0 0.0
        %1474 = vmatprep.subr.mxu0 0.0
        %1475 = vmatpush1.msra.mxu0 0.0
        %1476 = vmatprep.subr.mxu0 0.0
        %1477 = vmatpush1.msra.mxu0 0.0
        %1478 = vmatprep.subr.mxu0 0.0
        %1479 = vmatpush1.msra.mxu0 0.0
        %1480 = vmatprep.subr.mxu0 0.0
        %1481 = vmatpush1.msra.mxu0 0.0
        %1482 = vmatprep.subr.mxu0 0.0
        %1483 = vmatpush1.msra.mxu0 0.0
        %1484 = vmatprep.subr.mxu0 0.0
        %1485 = vmatpush1.msra.mxu0 0.0
        %1486 = vmatprep.subr.mxu0 0.0
        %1487 = vmatpush1.msra.mxu0 0.0
        %1488 = vmatprep.subr.mxu0 0.0
        %1489 = vmatpush1.msra.mxu0 %v1235
        %1490 = vmatprep.subr.mxu0 0.0
        %1491 = vmatpush2.msra.mxu0 0.0
        %1492 = vmatprep.subr.mxu0 0.0
        %1493 = vmatpush2.msra.mxu0 0.0
        %1494 = vmatprep.subr.mxu0 0.0
        %1495 = vmatpush2.msra.mxu0 0.0
        %1496 = vmatprep.subr.mxu0 0.0
        %1497 = vmatpush2.msra.mxu0 0.0
        %1498 = vmatprep.subr.mxu0 0.0
        %1499 = vmatpush2.msra.mxu0 0.0
        %1500 = vmatprep.subr.mxu0 0.0
        %1501 = vmatpush2.msra.mxu0 0.0
        %1502 = vmatprep.subr.mxu0 0.0
        %1503 = vmatpush2.msra.mxu0 0.0
        %1504 = vmatprep.subr.mxu0 0.0
        %1505 = vmatpush2.msra.mxu0 0.0
        %1506 = vmatprep.subr.mxu0 0.0
        %1507 = vmatpush2.msra.mxu0 0.0
        %1508 = vmatprep.subr.mxu0 0.0
        %1509 = vmatpush2.msra.mxu0 0.0
        %1510 = vmatprep.subr.mxu0 0.0
        %1511 = vmatpush2.msra.mxu0 0.0
        %1512 = vmatprep.subr.mxu0 0.0
        %1513 = vmatpush2.msra.mxu0 0.0
        %1514 = vmatprep.subr.mxu0 0.0
        %1515 = vmatpush2.msra.mxu0 0.0
        %1516 = vmatprep.subr.mxu0 0.0
        %1517 = vmatpush2.msra.mxu0 0.0
        %1518 = vmatprep.subr.mxu0 0.0
        %1519 = vmatpush2.msra.mxu0 0.0
        %1520 = vmatprep.subr.mxu0 0.0
        %1521 = vmatpush2.msra.mxu0 0.0
        %1522 = vmatprep.mubr.f32.mxu0 0.0
        %1523 = vmatmul.mubr.f32.gmra.mxu0 %v1456
        %v1524 = vpop.f32.mrf.mxu0
        %v1525 = vadd.f32 0.0, %v1524
        %v1526 = vpop.f32.mrf.mxu0
        %1527 = vdwg.mxu0
        %1529 = vrot.lane.b32.xlu0 %v1379, 8
        %v1530 = vpop.permute.xlu0 %1529
        %1533 = vrot.lane.b32.xlu0 %v1452, 16
        %v1534 = vpop.permute.xlu0 %1533
        %1537 = vrot.lane.b32.xlu0 %v1525, 24
        %v1538 = vpop.permute.xlu0 %1537
        %v1540 = vsel %vm887, %v1306, %v1530
        %vm1541 = vcmask 130048
        %v1542 = vsel %vm1541, %v1540, %v1534
        %vm1543 = vcmask 195584
        %v1544 = vsel %vm1543, %v1542, %v1538
        %v1545 = vld [vmem:[#allocation13] sm:$0xff]
        %v1546 = vld [vmem:[#allocation13 + $0x8] sm:$0xff]
        %v1547 = vld [vmem:[#allocation13 + $0x10] sm:$0xff]
        %v1548 = vld [vmem:[#allocation13 + $0x18] sm:$0xff]
        %v1549 = vld [vmem:[%s10] sm:$0x1]
        %v1551 = vlaneseq
        %v1552 = vshrl.u32 %v1551, 7
        %v1553 = vsub.s32 0, %v1552
        %v1554 = vrot.slane %v1549, %v1553
        %v1557 = vsel %vm794, %v1544, 0
        %1559 = vmatprep.subr.mxu0 0.0
        %1560 = vmatpush1.msra.mxu0 0.0
        %1561 = vmatprep.subr.mxu0 0.0
        %1562 = vmatpush1.msra.mxu0 0.0
        %1563 = vmatprep.subr.mxu0 0.0
        %1564 = vmatpush1.msra.mxu0 0.0
        %1565 = vmatprep.subr.mxu0 0.0
        %1566 = vmatpush1.msra.mxu0 0.0
        %1567 = vmatprep.subr.mxu0 0.0
        %1568 = vmatpush1.msra.mxu0 0.0
        %1569 = vmatprep.subr.mxu0 0.0
        %1570 = vmatpush1.msra.mxu0 0.0
        %1571 = vmatprep.subr.mxu0 0.0
        %1572 = vmatpush1.msra.mxu0 0.0
        %1573 = vmatprep.subr.mxu0 0.0
        %1574 = vmatpush1.msra.mxu0 0.0
        %1575 = vmatprep.subr.mxu0 0.0
        %1576 = vmatpush1.msra.mxu0 0.0
        %1577 = vmatprep.subr.mxu0 0.0
        %1578 = vmatpush1.msra.mxu0 0.0
        %1579 = vmatprep.subr.mxu0 0.0
        %1580 = vmatpush1.msra.mxu0 0.0
        %1581 = vmatprep.subr.mxu0 0.0
        %1582 = vmatpush1.msra.mxu0 0.0
        %1583 = vmatprep.subr.mxu0 0.0
        %1584 = vmatpush1.msra.mxu0 %v1548
        %1585 = vmatprep.subr.mxu0 0.0
        %1586 = vmatpush1.msra.mxu0 %v1547
        %1587 = vmatprep.subr.mxu0 0.0
        %1588 = vmatpush1.msra.mxu0 %v1546
        %1589 = vmatprep.subr.mxu0 0.0
        %1590 = vmatpush1.msra.mxu0 %v1545
        %1591 = vmatprep.subr.mxu0 0.0
        %1592 = vmatpush2.msra.mxu0 0.0
        %1593 = vmatprep.subr.mxu0 0.0
        %1594 = vmatpush2.msra.mxu0 0.0
        %1595 = vmatprep.subr.mxu0 0.0
        %1596 = vmatpush2.msra.mxu0 0.0
        %1597 = vmatprep.subr.mxu0 0.0
        %1598 = vmatpush2.msra.mxu0 0.0
        %1599 = vmatprep.subr.mxu0 0.0
        %1600 = vmatpush2.msra.mxu0 0.0
        %1601 = vmatprep.subr.mxu0 0.0
        %1602 = vmatpush2.msra.mxu0 0.0
        %1603 = vmatprep.subr.mxu0 0.0
        %1604 = vmatpush2.msra.mxu0 0.0
        %1605 = vmatprep.subr.mxu0 0.0
        %1606 = vmatpush2.msra.mxu0 0.0
        %1607 = vmatprep.subr.mxu0 0.0
        %1608 = vmatpush2.msra.mxu0 0.0
        %1609 = vmatprep.subr.mxu0 0.0
        %1610 = vmatpush2.msra.mxu0 0.0
        %1611 = vmatprep.subr.mxu0 0.0
        %1612 = vmatpush2.msra.mxu0 0.0
        %1613 = vmatprep.subr.mxu0 0.0
        %1614 = vmatpush2.msra.mxu0 0.0
        %1615 = vmatprep.subr.mxu0 0.0
        %1616 = vmatpush2.msra.mxu0 0.0
        %1617 = vmatprep.subr.mxu0 0.0
        %1618 = vmatpush2.msra.mxu0 0.0
        %1619 = vmatprep.subr.mxu0 0.0
        %1620 = vmatpush2.msra.mxu0 0.0
        %1621 = vmatprep.subr.mxu0 0.0
        %1622 = vmatpush2.msra.mxu0 0.0
        %1623 = vmatprep.mubr.f32.mxu0 0.0
        %1624 = vmatmul.mubr.f32.gmra.mxu0 %v1557
        %v1625 = vpop.f32.mrf.mxu0
        %v1626 = vadd.f32 %v1554, %v1625
        %v1627 = vpop.f32.mrf.mxu0
        %1628 = vdwg.mxu0
        %v1629 = vadd.f32 %v582, %v1626
        %v1630 = vsel %vm794, %v1629, 0.0
        %1631 = vadd.xlane.f32.xlu0 %v1630
        %v1632 = vpop.xlane.xlu0 %1631
        %v1633 = vrcp.pop 32.0
        %v1634 = vmul.f32 %v1632, %v1633
        %v1635 = vsub.f32 %v1629, %v1634
        %v1636 = vmul.f32 %v1635, %v1635
        %v1637 = vsel %vm794, %v1636, 0.0
        %1638 = vadd.xlane.f32.xlu0 %v1637
        %v1639 = vpop.xlane.xlu0 %1638
        %v1640 = vmul.f32 %v1639, %v1633
        %v1641 = vadd.f32 %v1640, 1e-12
        %v1642 = vrsqrt.pop %v1641
        %v1643 = vmul.f32 %v1635, %v1642
        %v1644 = vld [vmem:[%s11] sm:$0x1]
        %v1646 = vlaneseq
        %v1647 = vshrl.u32 %v1646, 7
        %v1648 = vsub.s32 0, %v1647
        %v1649 = vrot.slane %v1644, %v1648
        %v1651 = vmul.f32 %v1643, %v1649
        %v1652 = vld [vmem:[%s12] sm:$0x1]
        %v1654 = vlaneseq
        %v1655 = vshrl.u32 %v1654, 7
        %v1656 = vsub.s32 0, %v1655
        %v1657 = vrot.slane %v1652, %v1656
        %v1659 = vadd.f32 %v1651, %v1657
        %1660 = vst.msk [vmem:[%s578] sm:$0xff] %vm794, %v1659
        %s1661 = sand.u32 %s347, 1
        %s1662 = scalar_lea.sflag [#allocation6], %s1661
        %s1663 = sand.u32 %s347, 1
        %s1664 = smul.addr %s1663, 8
        %s1665 = scalar_lea.vmem [#allocation15], %s1664
        // Predicated region
        $region101: #{tpu_custom_call.1} parent=71 // pred_check
          %p1666 = pneg %p357
        $region102: #{tpu_custom_call.1} parent=71 // pred_check_branch
          %1668 = sbr.rel (%p1666) target = $region104
        $region103: #{tpu_custom_call.1} parent=71 // pred_region
          %s1670 = ssub.s32 128, 128
          %1671 = vsyncadd %s1662, %s1670
          %s1672 = sadd.s32 %s40, %s39
          %s1673 = smul.addr %s1672, 128
          %s1674 = scalar_lea.hbm %s13, %s1673
          %s1676 = sshll.u32 %s1665, 4
          %s1677 = int_to_ptr.vmem [resolvable:$true] %s1676
          %1679 = dma.vmem_to_hbm [thread:$0]  %s1677, 128, %s1674, %s1662
        $region104: #{tpu_custom_call.1} parent=71 // pred_fallthru
          _
      $region72: #{tpu_custom_call.1} parent=5 // pred_fallthru
        _
      %p1680 = scmp.le.s32.totalorder 2, %s30
      // Predicated region
      $region105: #{tpu_custom_call.1} parent=5 // pred_check
        %p1681 = pneg %p1680
      $region106: #{tpu_custom_call.1} parent=5 // pred_check_branch
        %1683 = sbr.rel (%p1681) target = $region108
      $region107: #{tpu_custom_call.1} parent=5 // pred_region
        %s1684 = ssub.s32 %s30, 2
        // Predicated region
        $region109: #{tpu_custom_call.1} parent=107 // pred_check
          %p1685 = pneg %p363
        $region110: #{tpu_custom_call.1} parent=107 // pred_check_branch
          %1687 = sbr.rel (%p1685) target = $region112
        $region111: #{tpu_custom_call.1} parent=107 // pred_region
          %s1688 = sand.u32 %s348, 1
          %s1689 = scalar_lea.sflag [#allocation6], %s1688
          %s1690 = sand.u32 %s348, 1
          %s1691 = smul.addr %s1690, 8
          %s1692 = scalar_lea.vmem [#allocation15], %s1691
          %1693 = dma.done %s1689, 128
        $region112: #{tpu_custom_call.1} parent=107 // pred_fallthru
          _
      $region108: #{tpu_custom_call.1} parent=5 // pred_fallthru
        _
    $region6: #{tpu_custom_call.1} parent=1 // loop_footer
      %s34 = sadd.s32 1, %s30
    $region7: #{tpu_custom_call.1} parent=1 // loop_footer_branch
      %29 = sbr.rel target = $region3
    $region8: #{tpu_custom_call.1} parent=1 // loop_exit
      _
    %1694 = vsyncpa [#allocation5], 1
    %s1695 = scalar_lea.sflag [#allocation5], 1
    %1696 = vsyncpa %s1695, 1
    %1697 = vsyncpa [#allocation8], 1
    %s1698 = scalar_lea.sflag [#allocation8], 1
    %1699 = vsyncpa %s1698, 1
    %1700 = vsyncpa [#allocation11], 1
    %1701 = vsyncpa [#allocation14], 1
    %1702 = vsyncpa [#allocation6], 1
    %s1703 = scalar_lea.sflag [#allocation6], 1
    %1704 = vsyncpa %s1703, 1

</llo_original>
